<compile_context>
chip_gen: v7x
topology: tpu7x:2x2x1
jax: 0.10.0
libtpu: 0.0.40
codegen_flags: <defaults>
</compile_context>

<pallas_src>
import jax
import jax.numpy as jnp
from jax.experimental import pallas as pl
from jax.experimental.pallas import tpu as pltpu

LANE = 128  # TPU lane width; vocab and classifier dims padded to this for lane-dense vregs.


def rnn_classify_kernel(tok_ref, embproj_ref, whh_ref, wcls_ref, bcls_ref, out_ref):
    """Single-invocation kernel: whole problem fits comfortably in VMEM.

    tok_ref     : (B, T)   int32  tokens, passed raw (no wrapper reshapes/transposes)
    embproj_ref : (Vp, D)  f32    emb_table @ W_ih^T, vocab zero-padded to Vp=128 rows
                                  (row 0 is zero -> padding_idx=0 honored exactly)
    whh_ref     : (D, D)   f32    W_hh^T (hidden -> hidden)
    wcls_ref    : (D, Cp)  f32    classifier weight^T, lane-padded to Cp=128
    bcls_ref    : (1, Cp)  f32    classifier bias, lane-padded
    out_ref     : (B, Cp)  f32    logits, lane-padded (wrapper slices back to C)
    """
    B, T = tok_ref.shape
    Vp, D = embproj_ref.shape

    tok = tok_ref[...]                                              # (B, T) int32
    vocab_ids = jax.lax.broadcasted_iota(jnp.int32, (B, Vp), 1)     # hoisted out of the loop
    embproj = embproj_ref[...]                                      # (Vp, D)
    whh = whh_ref[...]                                              # (D, D)

    # Serial recurrence. T is small & static -> fully unrolled. The per-step one-hot gather
    # matmul does NOT depend on h, so the scheduler overlaps it with the h-chain: only the T
    # small (B,D)x(D,D) matmuls + tanh sit on the critical path.
    # NOTE: tokens >= vocab_size hit a zero-padded emb_proj row (zero embedding) instead of
    # erroring like PyTorch; inputs here are bounded by construction.
    # TODO(synk): if T grows beyond ~8, switch to lax.fori_loop(..., unroll=True); keeping
    #             W_hh staged in the MXU via pltpu.matmul_push_rhs/_acc_lhs is a further
    #             critical-path win but is not needed at this latency-bound size.
    h = jnp.zeros((B, D), jnp.float32)
    for t in range(T):
        one_hot_t = (tok[:, t:t + 1] == vocab_ids).astype(jnp.float32)          # (B, Vp) lane-dense
        xw_t = jnp.dot(one_hot_t, embproj, preferred_element_type=jnp.float32)  # (B, D), off h-chain
        h = jnp.tanh(xw_t + jnp.dot(h, whh, preferred_element_type=jnp.float32))

    logits = jnp.dot(h, wcls_ref[...], preferred_element_type=jnp.float32) + bcls_ref[...]
    out_ref[...] = logits.astype(out_ref.dtype)


def prepare_inference_params(emb_table, w_ih_t, w_hh_t, w_cls_t, b_cls):
    """One-time (init) folding/padding so the per-call forward has zero wrapper glue ops.

    Returns (emb_proj_pad, w_hh_t, w_cls_pad, b_cls_pad, num_classes).
    """
    V, D = emb_table.shape
    C = w_cls_t.shape[1]
    Vp = pl.cdiv(V, LANE) * LANE
    Cp = pl.cdiv(C, LANE) * LANE

    emb_pad = jnp.zeros((Vp, D), jnp.float32).at[:V, :].set(emb_table.astype(jnp.float32))
    emb_proj_pad = emb_pad @ w_ih_t.astype(jnp.float32)            # (Vp, D); padded rows stay zero
    w_cls_pad = jnp.zeros((D, Cp), jnp.float32).at[:, :C].set(w_cls_t.astype(jnp.float32))
    b_cls_pad = jnp.zeros((1, Cp), jnp.float32).at[0, :C].set(b_cls.astype(jnp.float32))
    return emb_proj_pad, w_hh_t.astype(jnp.float32), w_cls_pad, b_cls_pad, C


def torch_demo_rnn_forward(tokens, emb_proj_pad, w_hh_t, w_cls_pad, b_cls_pad):
    """tokens: (B, T) int tokens. Returns logits (B, C) float32, C = sentence_length + 1."""
    B, T = tokens.shape
    Vp, D = emb_proj_pad.shape
    Cp = w_cls_pad.shape[1]
    C = T + 1  # classifier width per the module spec: Linear(D, sentence_length + 1)

    flops = (2 * T * B * Vp * D      # one-hot gather matmuls (off critical path)
             + 2 * T * B * D * D     # recurrence
             + 2 * B * D * Cp)       # classifier
    bytes_accessed = 4 * (B * T + Vp * D + D * D + D * Cp + Cp + B * Cp)

    vmem = pl.BlockSpec(memory_space=pltpu.MemorySpace.VMEM)
    logits_pad = pl.pallas_call(
        rnn_classify_kernel,
        out_shape=jax.ShapeDtypeStruct((B, Cp), jnp.float32),
        in_specs=[vmem] * 5,
        out_specs=vmem,
        cost_estimate=pl.CostEstimate(
            flops=flops, transcendentals=T * B * D, bytes_accessed=bytes_accessed),
    )(tokens.astype(jnp.int32), emb_proj_pad, w_hh_t, w_cls_pad, b_cls_pad)
    return logits_pad[:, :C]


def init_params(key, vocab_size, vector_dim, sentence_length):
    """Deterministic synthetic parameters with the same shapes as the torch module."""
    k_emb, k_ih, k_hh, k_cls_w, k_cls_b = jax.random.split(key, 5)
    D = vector_dim
    C = sentence_length + 1

    emb = jax.random.normal(k_emb, (vocab_size, D), jnp.float32) * 0.1
    emb = emb.at[0].set(0.0)  # padding_idx=0

    # nn.RNN weights are (hidden, input); we store the transpose (input, hidden).
    w_ih_t = jax.random.normal(k_ih, (D, D), jnp.float32) * (1.0 / jnp.sqrt(D))
    w_hh_t = jax.random.normal(k_hh, (D, D), jnp.float32) * (1.0 / jnp.sqrt(D))

    # nn.Linear weight is (C, D); we store the transpose (D, C).
    w_cls_t = jax.random.normal(k_cls_w, (D, C), jnp.float32) * (1.0 / jnp.sqrt(D))
    b_cls = jax.random.normal(k_cls_b, (C,), jnp.float32) * 0.01

    return emb, w_ih_t, w_hh_t, w_cls_t, b_cls


def reference_forward(tokens, emb_table, w_ih_t, w_hh_t, w_cls_t, b_cls):
    """Pure-JAX reference for correctness checking."""
    x = jnp.take(emb_table, tokens, axis=0)
    B, T, D = x.shape
    h = jnp.zeros((B, D), jnp.float32)
    for t in range(T):
        h = jnp.tanh(x[:, t, :] @ w_ih_t + h @ w_hh_t)
    return h @ w_cls_t + b_cls[None, :]


if __name__ == "__main__":
    # Module hyperparameters (small, consistent with the torch module's forward).
    VECTOR_DIM = 32        # vector_dim
    SENTENCE_LENGTH = 8    # sentence_length (T); classifier outputs sentence_length + 1
    VOCAB_SIZE = 30        # len(vocab)
    BATCH = 8

    key = jax.random.PRNGKey(0)
    k_params, k_tokens = jax.random.split(key)

    emb, w_ih_t, w_hh_t, w_cls_t, b_cls = init_params(
        k_params, VOCAB_SIZE, VECTOR_DIM, SENTENCE_LENGTH
    )
    tokens = jax.random.randint(
        k_tokens, (BATCH, SENTENCE_LENGTH), minval=0, maxval=VOCAB_SIZE, dtype=jnp.int32
    )

    # One-time parameter folding/padding (outside the per-call path).
    emb_proj_pad, w_hh_kernel, w_cls_pad, b_cls_pad, _C = prepare_inference_params(
        emb, w_ih_t, w_hh_t, w_cls_t, b_cls
    )

    fwd = jax.jit(torch_demo_rnn_forward)
    logits = jax.block_until_ready(
        fwd(tokens, emb_proj_pad, w_hh_kernel, w_cls_pad, b_cls_pad)
    )

    ref = reference_forward(tokens, emb, w_ih_t, w_hh_t, w_cls_t, b_cls)
    assert logits.shape == (BATCH, SENTENCE_LENGTH + 1)
    assert jnp.allclose(logits, ref, atol=2e-4, rtol=2e-4), "mismatch vs JAX reference"

    print("KERNEL_OK")
</pallas_src>

<mosaic_0001>
module attributes {stable_mosaic.version = 11 : i64} {
  func.func @rnn_classify_kernel(%arg0: memref<8x8xi32, #tpu.memory_space<vmem>>, %arg1: memref<128x32xf32, #tpu.memory_space<vmem>>, %arg2: memref<32x32xf32, #tpu.memory_space<vmem>>, %arg3: memref<32x128xf32, #tpu.memory_space<vmem>>, %arg4: memref<1x128xf32, #tpu.memory_space<vmem>>, %arg5: memref<8x128xf32, #tpu.memory_space<vmem>>) attributes {dimension_semantics = [], scalar_prefetch = 0 : i64, scratch_operands = 0 : i64, tpu.core_type = #tpu.core_type<tc>} {
    %c0 = arith.constant 0 : index
    %c0_0 = arith.constant 0 : index
    %0 = vector.load %arg0[%c0, %c0_0] : memref<8x8xi32, #tpu.memory_space<vmem>>, vector<8x8xi32>
    %1 = tpu.iota {dimensions = array<i32: 1>} : vector<8x128xi32>
    %c0_1 = arith.constant 0 : index
    %c0_2 = arith.constant 0 : index
    %2 = vector.load %arg1[%c0_1, %c0_2] : memref<128x32xf32, #tpu.memory_space<vmem>>, vector<128x32xf32>
    %c0_3 = arith.constant 0 : index
    %c0_4 = arith.constant 0 : index
    %3 = vector.load %arg2[%c0_3, %c0_4] : memref<32x32xf32, #tpu.memory_space<vmem>>, vector<32x32xf32>
    %cst = arith.constant 0.000000e+00 : f32
    %4 = vector.broadcast %cst : f32 to vector<8x32xf32>
    %5 = vector.extract_strided_slice %0 {offsets = [0, 0], sizes = [8, 1], strides = [1, 1]} : vector<8x8xi32> to vector<8x1xi32>
    %6 = vector.broadcast %5 : vector<8x1xi32> to vector<8x128xi32>
    %7 = arith.cmpi eq, %6, %1 : vector<8x128xi32>
    %8 = arith.extui %7 : vector<8x128xi1> to vector<8x128xi32>
    %9 = arith.sitofp %8 : vector<8x128xi32> to vector<8x128xf32>
    %cst_5 = arith.constant dense<0.000000e+00> : vector<8x32xf32>
    %10 = tpu.matmul %9, %2, %cst_5 {dimension_numbers = #tpu.dot_dimension_numbers<[1], [0], [0], [1], [0, 0, 1, 1], [], []>} : vector<8x128xf32>, vector<128x32xf32>, vector<8x32xf32> -> vector<8x32xf32>
    %cst_6 = arith.constant dense<0.000000e+00> : vector<8x32xf32>
    %11 = tpu.matmul %4, %3, %cst_6 {dimension_numbers = #tpu.dot_dimension_numbers<[1], [0], [0], [1], [0, 0, 1, 1], [], []>} : vector<8x32xf32>, vector<32x32xf32>, vector<8x32xf32> -> vector<8x32xf32>
    %12 = arith.addf %10, %11 : vector<8x32xf32>
    %13 = math.tanh %12 : vector<8x32xf32>
    %14 = vector.extract_strided_slice %0 {offsets = [0, 1], sizes = [8, 1], strides = [1, 1]} : vector<8x8xi32> to vector<8x1xi32>
    %15 = vector.broadcast %14 : vector<8x1xi32> to vector<8x128xi32>
    %16 = arith.cmpi eq, %15, %1 : vector<8x128xi32>
    %17 = arith.extui %16 : vector<8x128xi1> to vector<8x128xi32>
    %18 = arith.sitofp %17 : vector<8x128xi32> to vector<8x128xf32>
    %cst_7 = arith.constant dense<0.000000e+00> : vector<8x32xf32>
    %19 = tpu.matmul %18, %2, %cst_7 {dimension_numbers = #tpu.dot_dimension_numbers<[1], [0], [0], [1], [0, 0, 1, 1], [], []>} : vector<8x128xf32>, vector<128x32xf32>, vector<8x32xf32> -> vector<8x32xf32>
    %cst_8 = arith.constant dense<0.000000e+00> : vector<8x32xf32>
    %20 = tpu.matmul %13, %3, %cst_8 {dimension_numbers = #tpu.dot_dimension_numbers<[1], [0], [0], [1], [0, 0, 1, 1], [], []>} : vector<8x32xf32>, vector<32x32xf32>, vector<8x32xf32> -> vector<8x32xf32>
    %21 = arith.addf %19, %20 : vector<8x32xf32>
    %22 = math.tanh %21 : vector<8x32xf32>
    %23 = vector.extract_strided_slice %0 {offsets = [0, 2], sizes = [8, 1], strides = [1, 1]} : vector<8x8xi32> to vector<8x1xi32>
    %24 = vector.broadcast %23 : vector<8x1xi32> to vector<8x128xi32>
    %25 = arith.cmpi eq, %24, %1 : vector<8x128xi32>
    %26 = arith.extui %25 : vector<8x128xi1> to vector<8x128xi32>
    %27 = arith.sitofp %26 : vector<8x128xi32> to vector<8x128xf32>
    %cst_9 = arith.constant dense<0.000000e+00> : vector<8x32xf32>
    %28 = tpu.matmul %27, %2, %cst_9 {dimension_numbers = #tpu.dot_dimension_numbers<[1], [0], [0], [1], [0, 0, 1, 1], [], []>} : vector<8x128xf32>, vector<128x32xf32>, vector<8x32xf32> -> vector<8x32xf32>
    %cst_10 = arith.constant dense<0.000000e+00> : vector<8x32xf32>
    %29 = tpu.matmul %22, %3, %cst_10 {dimension_numbers = #tpu.dot_dimension_numbers<[1], [0], [0], [1], [0, 0, 1, 1], [], []>} : vector<8x32xf32>, vector<32x32xf32>, vector<8x32xf32> -> vector<8x32xf32>
    %30 = arith.addf %28, %29 : vector<8x32xf32>
    %31 = math.tanh %30 : vector<8x32xf32>
    %32 = vector.extract_strided_slice %0 {offsets = [0, 3], sizes = [8, 1], strides = [1, 1]} : vector<8x8xi32> to vector<8x1xi32>
    %33 = vector.broadcast %32 : vector<8x1xi32> to vector<8x128xi32>
    %34 = arith.cmpi eq, %33, %1 : vector<8x128xi32>
    %35 = arith.extui %34 : vector<8x128xi1> to vector<8x128xi32>
    %36 = arith.sitofp %35 : vector<8x128xi32> to vector<8x128xf32>
    %cst_11 = arith.constant dense<0.000000e+00> : vector<8x32xf32>
    %37 = tpu.matmul %36, %2, %cst_11 {dimension_numbers = #tpu.dot_dimension_numbers<[1], [0], [0], [1], [0, 0, 1, 1], [], []>} : vector<8x128xf32>, vector<128x32xf32>, vector<8x32xf32> -> vector<8x32xf32>
    %cst_12 = arith.constant dense<0.000000e+00> : vector<8x32xf32>
    %38 = tpu.matmul %31, %3, %cst_12 {dimension_numbers = #tpu.dot_dimension_numbers<[1], [0], [0], [1], [0, 0, 1, 1], [], []>} : vector<8x32xf32>, vector<32x32xf32>, vector<8x32xf32> -> vector<8x32xf32>
    %39 = arith.addf %37, %38 : vector<8x32xf32>
    %40 = math.tanh %39 : vector<8x32xf32>
    %41 = vector.extract_strided_slice %0 {offsets = [0, 4], sizes = [8, 1], strides = [1, 1]} : vector<8x8xi32> to vector<8x1xi32>
    %42 = vector.broadcast %41 : vector<8x1xi32> to vector<8x128xi32>
    %43 = arith.cmpi eq, %42, %1 : vector<8x128xi32>
    %44 = arith.extui %43 : vector<8x128xi1> to vector<8x128xi32>
    %45 = arith.sitofp %44 : vector<8x128xi32> to vector<8x128xf32>
    %cst_13 = arith.constant dense<0.000000e+00> : vector<8x32xf32>
    %46 = tpu.matmul %45, %2, %cst_13 {dimension_numbers = #tpu.dot_dimension_numbers<[1], [0], [0], [1], [0, 0, 1, 1], [], []>} : vector<8x128xf32>, vector<128x32xf32>, vector<8x32xf32> -> vector<8x32xf32>
    %cst_14 = arith.constant dense<0.000000e+00> : vector<8x32xf32>
    %47 = tpu.matmul %40, %3, %cst_14 {dimension_numbers = #tpu.dot_dimension_numbers<[1], [0], [0], [1], [0, 0, 1, 1], [], []>} : vector<8x32xf32>, vector<32x32xf32>, vector<8x32xf32> -> vector<8x32xf32>
    %48 = arith.addf %46, %47 : vector<8x32xf32>
    %49 = math.tanh %48 : vector<8x32xf32>
    %50 = vector.extract_strided_slice %0 {offsets = [0, 5], sizes = [8, 1], strides = [1, 1]} : vector<8x8xi32> to vector<8x1xi32>
    %51 = vector.broadcast %50 : vector<8x1xi32> to vector<8x128xi32>
    %52 = arith.cmpi eq, %51, %1 : vector<8x128xi32>
    %53 = arith.extui %52 : vector<8x128xi1> to vector<8x128xi32>
    %54 = arith.sitofp %53 : vector<8x128xi32> to vector<8x128xf32>
    %cst_15 = arith.constant dense<0.000000e+00> : vector<8x32xf32>
    %55 = tpu.matmul %54, %2, %cst_15 {dimension_numbers = #tpu.dot_dimension_numbers<[1], [0], [0], [1], [0, 0, 1, 1], [], []>} : vector<8x128xf32>, vector<128x32xf32>, vector<8x32xf32> -> vector<8x32xf32>
    %cst_16 = arith.constant dense<0.000000e+00> : vector<8x32xf32>
    %56 = tpu.matmul %49, %3, %cst_16 {dimension_numbers = #tpu.dot_dimension_numbers<[1], [0], [0], [1], [0, 0, 1, 1], [], []>} : vector<8x32xf32>, vector<32x32xf32>, vector<8x32xf32> -> vector<8x32xf32>
    %57 = arith.addf %55, %56 : vector<8x32xf32>
    %58 = math.tanh %57 : vector<8x32xf32>
    %59 = vector.extract_strided_slice %0 {offsets = [0, 6], sizes = [8, 1], strides = [1, 1]} : vector<8x8xi32> to vector<8x1xi32>
    %60 = vector.broadcast %59 : vector<8x1xi32> to vector<8x128xi32>
    %61 = arith.cmpi eq, %60, %1 : vector<8x128xi32>
    %62 = arith.extui %61 : vector<8x128xi1> to vector<8x128xi32>
    %63 = arith.sitofp %62 : vector<8x128xi32> to vector<8x128xf32>
    %cst_17 = arith.constant dense<0.000000e+00> : vector<8x32xf32>
    %64 = tpu.matmul %63, %2, %cst_17 {dimension_numbers = #tpu.dot_dimension_numbers<[1], [0], [0], [1], [0, 0, 1, 1], [], []>} : vector<8x128xf32>, vector<128x32xf32>, vector<8x32xf32> -> vector<8x32xf32>
    %cst_18 = arith.constant dense<0.000000e+00> : vector<8x32xf32>
    %65 = tpu.matmul %58, %3, %cst_18 {dimension_numbers = #tpu.dot_dimension_numbers<[1], [0], [0], [1], [0, 0, 1, 1], [], []>} : vector<8x32xf32>, vector<32x32xf32>, vector<8x32xf32> -> vector<8x32xf32>
    %66 = arith.addf %64, %65 : vector<8x32xf32>
    %67 = math.tanh %66 : vector<8x32xf32>
    %68 = vector.extract_strided_slice %0 {offsets = [0, 7], sizes = [8, 1], strides = [1, 1]} : vector<8x8xi32> to vector<8x1xi32>
    %69 = vector.broadcast %68 : vector<8x1xi32> to vector<8x128xi32>
    %70 = arith.cmpi eq, %69, %1 : vector<8x128xi32>
    %71 = arith.extui %70 : vector<8x128xi1> to vector<8x128xi32>
    %72 = arith.sitofp %71 : vector<8x128xi32> to vector<8x128xf32>
    %cst_19 = arith.constant dense<0.000000e+00> : vector<8x32xf32>
    %73 = tpu.matmul %72, %2, %cst_19 {dimension_numbers = #tpu.dot_dimension_numbers<[1], [0], [0], [1], [0, 0, 1, 1], [], []>} : vector<8x128xf32>, vector<128x32xf32>, vector<8x32xf32> -> vector<8x32xf32>
    %cst_20 = arith.constant dense<0.000000e+00> : vector<8x32xf32>
    %74 = tpu.matmul %67, %3, %cst_20 {dimension_numbers = #tpu.dot_dimension_numbers<[1], [0], [0], [1], [0, 0, 1, 1], [], []>} : vector<8x32xf32>, vector<32x32xf32>, vector<8x32xf32> -> vector<8x32xf32>
    %75 = arith.addf %73, %74 : vector<8x32xf32>
    %76 = math.tanh %75 : vector<8x32xf32>
    %c0_21 = arith.constant 0 : index
    %c0_22 = arith.constant 0 : index
    %77 = vector.load %arg3[%c0_21, %c0_22] : memref<32x128xf32, #tpu.memory_space<vmem>>, vector<32x128xf32>
    %cst_23 = arith.constant dense<0.000000e+00> : vector<8x128xf32>
    %78 = tpu.matmul %76, %77, %cst_23 {dimension_numbers = #tpu.dot_dimension_numbers<[1], [0], [0], [1], [0, 0, 1, 1], [], []>} : vector<8x32xf32>, vector<32x128xf32>, vector<8x128xf32> -> vector<8x128xf32>
    %c0_24 = arith.constant 0 : index
    %c0_25 = arith.constant 0 : index
    %79 = vector.load %arg4[%c0_24, %c0_25] : memref<1x128xf32, #tpu.memory_space<vmem>>, vector<1x128xf32>
    %80 = vector.broadcast %79 : vector<1x128xf32> to vector<8x128xf32>
    %81 = arith.addf %78, %80 : vector<8x128xf32>
    %c0_26 = arith.constant 0 : index
    %c0_27 = arith.constant 0 : index
    %82 = vector.load %arg5[%c0_26, %c0_27] : memref<8x128xf32, #tpu.memory_space<vmem>>, vector<8x128xf32>
    tpu.vector_store %arg5[%c0_26, %c0_27], %81 {strides = array<i32>} : memref<8x128xf32, #tpu.memory_space<vmem>>, vector<8x128xf32>,
    return
  }
}

</mosaic_0001>

<llo_original>
// kernel: torch_demo_rnn_forward.1
$region0: #{torch_demo_rnn_forward.1}
  #allocation0 [shape = 'u32[]', space=smem, size = 0x4, offset = 0x4, fixed_abs, tag = 'smem constant byte address 0x4 - core index']
  #allocation1 [shape = 'u32[144,128]{1,0:T(1,128)}', space=vmem, size = 0x12000, scoped, tag = 'internal scratch']
  %s0 = inlined_call_operand.vmem [shape: s32[8,8], index: 0, kind: input, shape index: {}]
  %s1 = inlined_call_operand.vmem [shape: f32[128,32], index: 1, kind: input, shape index: {}]
  %s2 = inlined_call_operand.vmem [shape: f32[32,32], index: 2, kind: input, shape index: {}]
  %s3 = inlined_call_operand.vmem [shape: f32[32,128], index: 3, kind: input, shape index: {}]
  %s4 = inlined_call_operand.vmem [shape: f32[1,128], index: 4, kind: input, shape index: {}]
  %s5 = inlined_call_operand.hbm [shape: f32[8,128], index: 5, kind: output, shape index: {}]
  %s6 = sld [smem:[#allocation0]]
  $region30: #{torch_demo_rnn_forward.1} parent=0
    _
  %s8 = ssub.s32 1, %s6
  %s9 = scalar_select 0, %s8, %s6
  $region1: #{torch_demo_rnn_forward.1} parent=0
    #allocation2 [shape = 'u8[4096]{0}', space=vmem, size = 0x1000, scoped, tag = 'output window, operand 0, single buffered']
    #allocation3 [shape = 's32[1]{0}', space=sflag, size = 0x4, scoped, tag = 'scoped memory for torch_demo_rnn_forward.1']
    %10 = vsyncpa [#allocation3], 0
    // Predicated region
    $region2: #{torch_demo_rnn_forward.1} parent=1 // pred_check
      _
    $region3: #{torch_demo_rnn_forward.1} parent=1 // pred_check_branch
      %12 = sbr.rel (0) target = $region5
    $region4: #{torch_demo_rnn_forward.1} parent=1 // pred_region
      _
    $region5: #{torch_demo_rnn_forward.1} parent=1 // pred_fallthru
      _
    // Predicated region
    $region6: #{torch_demo_rnn_forward.1} parent=1 // pred_check
      _
    $region7: #{torch_demo_rnn_forward.1} parent=1 // pred_check_branch
      %14 = sbr.rel (0) target = $region9
    $region8: #{torch_demo_rnn_forward.1} parent=1 // pred_region
      _
    $region9: #{torch_demo_rnn_forward.1} parent=1 // pred_fallthru
      _
    // Predicated region
    $region10: #{torch_demo_rnn_forward.1} parent=1 // pred_check
      _
    $region11: #{torch_demo_rnn_forward.1} parent=1 // pred_check_branch
      %16 = sbr.rel (0) target = $region13
    $region12: #{torch_demo_rnn_forward.1} parent=1 // pred_region
      _
    $region13: #{torch_demo_rnn_forward.1} parent=1 // pred_fallthru
      _
    // Predicated region
    $region14: #{torch_demo_rnn_forward.1} parent=1 // pred_check
      _
    $region15: #{torch_demo_rnn_forward.1} parent=1 // pred_check_branch
      %18 = sbr.rel (0) target = $region17
    $region16: #{torch_demo_rnn_forward.1} parent=1 // pred_region
      _
    $region17: #{torch_demo_rnn_forward.1} parent=1 // pred_fallthru
      _
    // Predicated region
    $region18: #{torch_demo_rnn_forward.1} parent=1 // pred_check
      _
    $region19: #{torch_demo_rnn_forward.1} parent=1 // pred_check_branch
      %20 = sbr.rel (0) target = $region21
    $region20: #{torch_demo_rnn_forward.1} parent=1 // pred_region
      _
    $region21: #{torch_demo_rnn_forward.1} parent=1 // pred_fallthru
      _
    %v21 = vld [vmem:[%s0] sm:$0xff]
    %v22 = vlaneseq
    %v23 = vand.u32 %v22, 127
    %v24 = vld [vmem:[%s1] sm:$0xff]
    %v25 = vld [vmem:[%s1 + $0x8] sm:$0xff]
    %v26 = vld [vmem:[%s1 + $0x10] sm:$0xff]
    %v27 = vld [vmem:[%s1 + $0x18] sm:$0xff]
    %v28 = vld [vmem:[%s1 + $0x20] sm:$0xff]
    %v29 = vld [vmem:[%s1 + $0x28] sm:$0xff]
    %v30 = vld [vmem:[%s1 + $0x30] sm:$0xff]
    %v31 = vld [vmem:[%s1 + $0x38] sm:$0xff]
    %v32 = vld [vmem:[%s1 + $0x40] sm:$0xff]
    %v33 = vld [vmem:[%s1 + $0x48] sm:$0xff]
    %v34 = vld [vmem:[%s1 + $0x50] sm:$0xff]
    %v35 = vld [vmem:[%s1 + $0x58] sm:$0xff]
    %v36 = vld [vmem:[%s1 + $0x60] sm:$0xff]
    %v37 = vld [vmem:[%s1 + $0x68] sm:$0xff]
    %v38 = vld [vmem:[%s1 + $0x70] sm:$0xff]
    %v39 = vld [vmem:[%s1 + $0x78] sm:$0xff]
    %v40 = vld [vmem:[%s2] sm:$0xff]
    %v41 = vld [vmem:[%s2 + $0x8] sm:$0xff]
    %v42 = vld [vmem:[%s2 + $0x10] sm:$0xff]
    %v43 = vld [vmem:[%s2 + $0x18] sm:$0xff]
    %44 = vset.pattern.permute.xlu0 0
    %45 = vperm.xlu0 %44, %v21
    %v46 = vpop.permute.xlu0 %45
    %vm47 = vcmp.eq.s32.totalorder %v46, %v23
    %v48 = vsel %vm47, 1, 0
    %v49 = vcvt.s32.f32 %v48
    %vm50 = vcmask 261120
    %v52 = vsel %vm50, 0.0, 0
    %54 = vmatprep.subr.mxu0 0.0
    %55 = vmatpush1.msra.mxu0 %v40
    %56 = vmatprep.subr.mxu0 0.0
    %57 = vmatpush1.msra.mxu0 %v41
    %58 = vmatprep.subr.mxu0 0.0
    %59 = vmatpush1.msra.mxu0 %v42
    %60 = vmatprep.subr.mxu0 0.0
    %61 = vmatpush1.msra.mxu0 %v43
    %62 = vmatprep.subr.mxu0 0.0
    %63 = vmatpush1.msra.mxu0 0.0
    %64 = vmatprep.subr.mxu0 0.0
    %65 = vmatpush1.msra.mxu0 0.0
    %66 = vmatprep.subr.mxu0 0.0
    %67 = vmatpush1.msra.mxu0 0.0
    %68 = vmatprep.subr.mxu0 0.0
    %69 = vmatpush1.msra.mxu0 0.0
    %70 = vmatprep.subr.mxu0 0.0
    %71 = vmatpush1.msra.mxu0 0.0
    %72 = vmatprep.subr.mxu0 0.0
    %73 = vmatpush1.msra.mxu0 0.0
    %74 = vmatprep.subr.mxu0 0.0
    %75 = vmatpush1.msra.mxu0 0.0
    %76 = vmatprep.subr.mxu0 0.0
    %77 = vmatpush1.msra.mxu0 0.0
    %78 = vmatprep.subr.mxu0 0.0
    %79 = vmatpush1.msra.mxu0 0.0
    %80 = vmatprep.subr.mxu0 0.0
    %81 = vmatpush1.msra.mxu0 0.0
    %82 = vmatprep.subr.mxu0 0.0
    %83 = vmatpush1.msra.mxu0 0.0
    %84 = vmatprep.subr.mxu0 0.0
    %85 = vmatpush1.msra.mxu0 0.0
    %86 = vmatprep.subr.mxu0 0.0
    %87 = vmatpush1.msra.mxu0 0.0
    %88 = vmatprep.subr.mxu0 0.0
    %89 = vmatpush1.msra.mxu0 0.0
    %90 = vmatprep.subr.mxu0 0.0
    %91 = vmatpush1.msra.mxu0 0.0
    %92 = vmatprep.subr.mxu0 0.0
    %93 = vmatpush1.msra.mxu0 0.0
    %94 = vmatprep.subr.mxu0 0.0
    %95 = vmatpush1.msra.mxu0 0.0
    %96 = vmatprep.subr.mxu0 0.0
    %97 = vmatpush1.msra.mxu0 0.0
    %98 = vmatprep.subr.mxu0 0.0
    %99 = vmatpush1.msra.mxu0 0.0
    %100 = vmatprep.subr.mxu0 0.0
    %101 = vmatpush1.msra.mxu0 0.0
    %102 = vmatprep.subr.mxu0 0.0
    %103 = vmatpush1.msra.mxu0 0.0
    %104 = vmatprep.subr.mxu0 0.0
    %105 = vmatpush1.msra.mxu0 0.0
    %106 = vmatprep.subr.mxu0 0.0
    %107 = vmatpush1.msra.mxu0 0.0
    %108 = vmatprep.subr.mxu0 0.0
    %109 = vmatpush1.msra.mxu0 0.0
    %110 = vmatprep.subr.mxu0 0.0
    %111 = vmatpush1.msra.mxu0 0.0
    %112 = vmatprep.subr.mxu0 0.0
    %113 = vmatpush1.msra.mxu0 0.0
    %114 = vmatprep.subr.mxu0 0.0
    %115 = vmatpush1.msra.mxu0 0.0
    %116 = vmatprep.subr.mxu0 0.0
    %117 = vmatpush1.msra.mxu0 0.0
    %118 = vmatprep.mubr.f32.mxu0 0.0
    %119 = vmatmul.mubr.f32.gmra.mrb[0].mxu0 %v52
    %v120 = vpop.f32.mrb[0].mxu0
    %v121 = vadd.f32 0.0, %v120
    %v122 = vpop.f32.mrb[0].mxu0
    %123 = vdwg.mxu0
    %124 = vmatprep.subr.mxu0 0.0
    %125 = vmatpush1.msra.mxu0 %v24
    %126 = vmatprep.subr.mxu0 0.0
    %127 = vmatpush1.msra.mxu0 %v25
    %128 = vmatprep.subr.mxu0 0.0
    %129 = vmatpush1.msra.mxu0 %v26
    %130 = vmatprep.subr.mxu0 0.0
    %131 = vmatpush1.msra.mxu0 %v27
    %132 = vmatprep.subr.mxu0 0.0
    %133 = vmatpush1.msra.mxu0 %v28
    %134 = vmatprep.subr.mxu0 0.0
    %135 = vmatpush1.msra.mxu0 %v29
    %136 = vmatprep.subr.mxu0 0.0
    %137 = vmatpush1.msra.mxu0 %v30
    %138 = vmatprep.subr.mxu0 0.0
    %139 = vmatpush1.msra.mxu0 %v31
    %140 = vmatprep.subr.mxu0 0.0
    %141 = vmatpush1.msra.mxu0 %v32
    %142 = vmatprep.subr.mxu0 0.0
    %143 = vmatpush1.msra.mxu0 %v33
    %144 = vmatprep.subr.mxu0 0.0
    %145 = vmatpush1.msra.mxu0 %v34
    %146 = vmatprep.subr.mxu0 0.0
    %147 = vmatpush1.msra.mxu0 %v35
    %148 = vmatprep.subr.mxu0 0.0
    %149 = vmatpush1.msra.mxu0 %v36
    %150 = vmatprep.subr.mxu0 0.0
    %151 = vmatpush1.msra.mxu0 %v37
    %152 = vmatprep.subr.mxu0 0.0
    %153 = vmatpush1.msra.mxu0 %v38
    %154 = vmatprep.subr.mxu0 0.0
    %155 = vmatpush1.msra.mxu0 %v39
    %156 = vmatprep.subr.mxu0 0.0
    %157 = vmatpush1.msra.mxu0 0.0
    %158 = vmatprep.subr.mxu0 0.0
    %159 = vmatpush1.msra.mxu0 0.0
    %160 = vmatprep.subr.mxu0 0.0
    %161 = vmatpush1.msra.mxu0 0.0
    %162 = vmatprep.subr.mxu0 0.0
    %163 = vmatpush1.msra.mxu0 0.0
    %164 = vmatprep.subr.mxu0 0.0
    %165 = vmatpush1.msra.mxu0 0.0
    %166 = vmatprep.subr.mxu0 0.0
    %167 = vmatpush1.msra.mxu0 0.0
    %168 = vmatprep.subr.mxu0 0.0
    %169 = vmatpush1.msra.mxu0 0.0
    %170 = vmatprep.subr.mxu0 0.0
    %171 = vmatpush1.msra.mxu0 0.0
    %172 = vmatprep.subr.mxu0 0.0
    %173 = vmatpush1.msra.mxu0 0.0
    %174 = vmatprep.subr.mxu0 0.0
    %175 = vmatpush1.msra.mxu0 0.0
    %176 = vmatprep.subr.mxu0 0.0
    %177 = vmatpush1.msra.mxu0 0.0
    %178 = vmatprep.subr.mxu0 0.0
    %179 = vmatpush1.msra.mxu0 0.0
    %180 = vmatprep.subr.mxu0 0.0
    %181 = vmatpush1.msra.mxu0 0.0
    %182 = vmatprep.subr.mxu0 0.0
    %183 = vmatpush1.msra.mxu0 0.0
    %184 = vmatprep.subr.mxu0 0.0
    %185 = vmatpush1.msra.mxu0 0.0
    %186 = vmatprep.subr.mxu0 0.0
    %187 = vmatpush1.msra.mxu0 0.0
    %188 = vmatprep.mubr.f32.mxu0 0.0
    %189 = vmatmul.mubr.f32.gmra.mrb[0].mxu0 %v49
    %v190 = vpop.f32.mrb[0].mxu0
    %v191 = vadd.f32 %v121, %v190
    %v192 = vpop.f32.mrb[0].mxu0
    %193 = vdwg.mxu0
    %v194 = vtanh.pop %v191
    %195 = vset.pattern.permute.xlu0 1
    %196 = vperm.xlu0 %195, %v21
    %v197 = vpop.permute.xlu0 %196
    %vm198 = vcmp.eq.s32.totalorder %v197, %v23
    %v199 = vsel %vm198, 1, 0
    %v200 = vcvt.s32.f32 %v199
    %v202 = vsel %vm50, %v194, 0
    %204 = vmatprep.subr.mxu0 0.0
    %205 = vmatpush1.msra.mxu0 %v40
    %206 = vmatprep.subr.mxu0 0.0
    %207 = vmatpush1.msra.mxu0 %v41
    %208 = vmatprep.subr.mxu0 0.0
    %209 = vmatpush1.msra.mxu0 %v42
    %210 = vmatprep.subr.mxu0 0.0
    %211 = vmatpush1.msra.mxu0 %v43
    %212 = vmatprep.subr.mxu0 0.0
    %213 = vmatpush1.msra.mxu0 0.0
    %214 = vmatprep.subr.mxu0 0.0
    %215 = vmatpush1.msra.mxu0 0.0
    %216 = vmatprep.subr.mxu0 0.0
    %217 = vmatpush1.msra.mxu0 0.0
    %218 = vmatprep.subr.mxu0 0.0
    %219 = vmatpush1.msra.mxu0 0.0
    %220 = vmatprep.subr.mxu0 0.0
    %221 = vmatpush1.msra.mxu0 0.0
    %222 = vmatprep.subr.mxu0 0.0
    %223 = vmatpush1.msra.mxu0 0.0
    %224 = vmatprep.subr.mxu0 0.0
    %225 = vmatpush1.msra.mxu0 0.0
    %226 = vmatprep.subr.mxu0 0.0
    %227 = vmatpush1.msra.mxu0 0.0
    %228 = vmatprep.subr.mxu0 0.0
    %229 = vmatpush1.msra.mxu0 0.0
    %230 = vmatprep.subr.mxu0 0.0
    %231 = vmatpush1.msra.mxu0 0.0
    %232 = vmatprep.subr.mxu0 0.0
    %233 = vmatpush1.msra.mxu0 0.0
    %234 = vmatprep.subr.mxu0 0.0
    %235 = vmatpush1.msra.mxu0 0.0
    %236 = vmatprep.subr.mxu0 0.0
    %237 = vmatpush1.msra.mxu0 0.0
    %238 = vmatprep.subr.mxu0 0.0
    %239 = vmatpush1.msra.mxu0 0.0
    %240 = vmatprep.subr.mxu0 0.0
    %241 = vmatpush1.msra.mxu0 0.0
    %242 = vmatprep.subr.mxu0 0.0
    %243 = vmatpush1.msra.mxu0 0.0
    %244 = vmatprep.subr.mxu0 0.0
    %245 = vmatpush1.msra.mxu0 0.0
    %246 = vmatprep.subr.mxu0 0.0
    %247 = vmatpush1.msra.mxu0 0.0
    %248 = vmatprep.subr.mxu0 0.0
    %249 = vmatpush1.msra.mxu0 0.0
    %250 = vmatprep.subr.mxu0 0.0
    %251 = vmatpush1.msra.mxu0 0.0
    %252 = vmatprep.subr.mxu0 0.0
    %253 = vmatpush1.msra.mxu0 0.0
    %254 = vmatprep.subr.mxu0 0.0
    %255 = vmatpush1.msra.mxu0 0.0
    %256 = vmatprep.subr.mxu0 0.0
    %257 = vmatpush1.msra.mxu0 0.0
    %258 = vmatprep.subr.mxu0 0.0
    %259 = vmatpush1.msra.mxu0 0.0
    %260 = vmatprep.subr.mxu0 0.0
    %261 = vmatpush1.msra.mxu0 0.0
    %262 = vmatprep.subr.mxu0 0.0
    %263 = vmatpush1.msra.mxu0 0.0
    %264 = vmatprep.subr.mxu0 0.0
    %265 = vmatpush1.msra.mxu0 0.0
    %266 = vmatprep.subr.mxu0 0.0
    %267 = vmatpush1.msra.mxu0 0.0
    %268 = vmatprep.mubr.f32.mxu0 0.0
    %269 = vmatmul.mubr.f32.gmra.mrb[0].mxu0 %v202
    %v270 = vpop.f32.mrb[0].mxu0
    %v271 = vadd.f32 0.0, %v270
    %v272 = vpop.f32.mrb[0].mxu0
    %273 = vdwg.mxu0
    %274 = vmatprep.subr.mxu0 0.0
    %275 = vmatpush1.msra.mxu0 %v24
    %276 = vmatprep.subr.mxu0 0.0
    %277 = vmatpush1.msra.mxu0 %v25
    %278 = vmatprep.subr.mxu0 0.0
    %279 = vmatpush1.msra.mxu0 %v26
    %280 = vmatprep.subr.mxu0 0.0
    %281 = vmatpush1.msra.mxu0 %v27
    %282 = vmatprep.subr.mxu0 0.0
    %283 = vmatpush1.msra.mxu0 %v28
    %284 = vmatprep.subr.mxu0 0.0
    %285 = vmatpush1.msra.mxu0 %v29
    %286 = vmatprep.subr.mxu0 0.0
    %287 = vmatpush1.msra.mxu0 %v30
    %288 = vmatprep.subr.mxu0 0.0
    %289 = vmatpush1.msra.mxu0 %v31
    %290 = vmatprep.subr.mxu0 0.0
    %291 = vmatpush1.msra.mxu0 %v32
    %292 = vmatprep.subr.mxu0 0.0
    %293 = vmatpush1.msra.mxu0 %v33
    %294 = vmatprep.subr.mxu0 0.0
    %295 = vmatpush1.msra.mxu0 %v34
    %296 = vmatprep.subr.mxu0 0.0
    %297 = vmatpush1.msra.mxu0 %v35
    %298 = vmatprep.subr.mxu0 0.0
    %299 = vmatpush1.msra.mxu0 %v36
    %300 = vmatprep.subr.mxu0 0.0
    %301 = vmatpush1.msra.mxu0 %v37
    %302 = vmatprep.subr.mxu0 0.0
    %303 = vmatpush1.msra.mxu0 %v38
    %304 = vmatprep.subr.mxu0 0.0
    %305 = vmatpush1.msra.mxu0 %v39
    %306 = vmatprep.subr.mxu0 0.0
    %307 = vmatpush1.msra.mxu0 0.0
    %308 = vmatprep.subr.mxu0 0.0
    %309 = vmatpush1.msra.mxu0 0.0
    %310 = vmatprep.subr.mxu0 0.0
    %311 = vmatpush1.msra.mxu0 0.0
    %312 = vmatprep.subr.mxu0 0.0
    %313 = vmatpush1.msra.mxu0 0.0
    %314 = vmatprep.subr.mxu0 0.0
    %315 = vmatpush1.msra.mxu0 0.0
    %316 = vmatprep.subr.mxu0 0.0
    %317 = vmatpush1.msra.mxu0 0.0
    %318 = vmatprep.subr.mxu0 0.0
    %319 = vmatpush1.msra.mxu0 0.0
    %320 = vmatprep.subr.mxu0 0.0
    %321 = vmatpush1.msra.mxu0 0.0
    %322 = vmatprep.subr.mxu0 0.0
    %323 = vmatpush1.msra.mxu0 0.0
    %324 = vmatprep.subr.mxu0 0.0
    %325 = vmatpush1.msra.mxu0 0.0
    %326 = vmatprep.subr.mxu0 0.0
    %327 = vmatpush1.msra.mxu0 0.0
    %328 = vmatprep.subr.mxu0 0.0
    %329 = vmatpush1.msra.mxu0 0.0
    %330 = vmatprep.subr.mxu0 0.0
    %331 = vmatpush1.msra.mxu0 0.0
    %332 = vmatprep.subr.mxu0 0.0
    %333 = vmatpush1.msra.mxu0 0.0
    %334 = vmatprep.subr.mxu0 0.0
    %335 = vmatpush1.msra.mxu0 0.0
    %336 = vmatprep.subr.mxu0 0.0
    %337 = vmatpush1.msra.mxu0 0.0
    %338 = vmatprep.mubr.f32.mxu0 0.0
    %339 = vmatmul.mubr.f32.gmra.mrb[0].mxu0 %v200
    %v340 = vpop.f32.mrb[0].mxu0
    %v341 = vadd.f32 %v271, %v340
    %v342 = vpop.f32.mrb[0].mxu0
    %343 = vdwg.mxu0
    %v344 = vtanh.pop %v341
    %345 = vset.pattern.permute.xlu0 2
    %346 = vperm.xlu0 %345, %v21
    %v347 = vpop.permute.xlu0 %346
    %vm348 = vcmp.eq.s32.totalorder %v347, %v23
    %v349 = vsel %vm348, 1, 0
    %v350 = vcvt.s32.f32 %v349
    %v352 = vsel %vm50, %v344, 0
    %354 = vmatprep.subr.mxu0 0.0
    %355 = vmatpush1.msra.mxu0 %v40
    %356 = vmatprep.subr.mxu0 0.0
    %357 = vmatpush1.msra.mxu0 %v41
    %358 = vmatprep.subr.mxu0 0.0
    %359 = vmatpush1.msra.mxu0 %v42
    %360 = vmatprep.subr.mxu0 0.0
    %361 = vmatpush1.msra.mxu0 %v43
    %362 = vmatprep.subr.mxu0 0.0
    %363 = vmatpush1.msra.mxu0 0.0
    %364 = vmatprep.subr.mxu0 0.0
    %365 = vmatpush1.msra.mxu0 0.0
    %366 = vmatprep.subr.mxu0 0.0
    %367 = vmatpush1.msra.mxu0 0.0
    %368 = vmatprep.subr.mxu0 0.0
    %369 = vmatpush1.msra.mxu0 0.0
    %370 = vmatprep.subr.mxu0 0.0
    %371 = vmatpush1.msra.mxu0 0.0
    %372 = vmatprep.subr.mxu0 0.0
    %373 = vmatpush1.msra.mxu0 0.0
    %374 = vmatprep.subr.mxu0 0.0
    %375 = vmatpush1.msra.mxu0 0.0
    %376 = vmatprep.subr.mxu0 0.0
    %377 = vmatpush1.msra.mxu0 0.0
    %378 = vmatprep.subr.mxu0 0.0
    %379 = vmatpush1.msra.mxu0 0.0
    %380 = vmatprep.subr.mxu0 0.0
    %381 = vmatpush1.msra.mxu0 0.0
    %382 = vmatprep.subr.mxu0 0.0
    %383 = vmatpush1.msra.mxu0 0.0
    %384 = vmatprep.subr.mxu0 0.0
    %385 = vmatpush1.msra.mxu0 0.0
    %386 = vmatprep.subr.mxu0 0.0
    %387 = vmatpush1.msra.mxu0 0.0
    %388 = vmatprep.subr.mxu0 0.0
    %389 = vmatpush1.msra.mxu0 0.0
    %390 = vmatprep.subr.mxu0 0.0
    %391 = vmatpush1.msra.mxu0 0.0
    %392 = vmatprep.subr.mxu0 0.0
    %393 = vmatpush1.msra.mxu0 0.0
    %394 = vmatprep.subr.mxu0 0.0
    %395 = vmatpush1.msra.mxu0 0.0
    %396 = vmatprep.subr.mxu0 0.0
    %397 = vmatpush1.msra.mxu0 0.0
    %398 = vmatprep.subr.mxu0 0.0
    %399 = vmatpush1.msra.mxu0 0.0
    %400 = vmatprep.subr.mxu0 0.0
    %401 = vmatpush1.msra.mxu0 0.0
    %402 = vmatprep.subr.mxu0 0.0
    %403 = vmatpush1.msra.mxu0 0.0
    %404 = vmatprep.subr.mxu0 0.0
    %405 = vmatpush1.msra.mxu0 0.0
    %406 = vmatprep.subr.mxu0 0.0
    %407 = vmatpush1.msra.mxu0 0.0
    %408 = vmatprep.subr.mxu0 0.0
    %409 = vmatpush1.msra.mxu0 0.0
    %410 = vmatprep.subr.mxu0 0.0
    %411 = vmatpush1.msra.mxu0 0.0
    %412 = vmatprep.subr.mxu0 0.0
    %413 = vmatpush1.msra.mxu0 0.0
    %414 = vmatprep.subr.mxu0 0.0
    %415 = vmatpush1.msra.mxu0 0.0
    %416 = vmatprep.subr.mxu0 0.0
    %417 = vmatpush1.msra.mxu0 0.0
    %418 = vmatprep.mubr.f32.mxu0 0.0
    %419 = vmatmul.mubr.f32.gmra.mrb[0].mxu0 %v352
    %v420 = vpop.f32.mrb[0].mxu0
    %v421 = vadd.f32 0.0, %v420
    %v422 = vpop.f32.mrb[0].mxu0
    %423 = vdwg.mxu0
    %424 = vmatprep.subr.mxu0 0.0
    %425 = vmatpush1.msra.mxu0 %v24
    %426 = vmatprep.subr.mxu0 0.0
    %427 = vmatpush1.msra.mxu0 %v25
    %428 = vmatprep.subr.mxu0 0.0
    %429 = vmatpush1.msra.mxu0 %v26
    %430 = vmatprep.subr.mxu0 0.0
    %431 = vmatpush1.msra.mxu0 %v27
    %432 = vmatprep.subr.mxu0 0.0
    %433 = vmatpush1.msra.mxu0 %v28
    %434 = vmatprep.subr.mxu0 0.0
    %435 = vmatpush1.msra.mxu0 %v29
    %436 = vmatprep.subr.mxu0 0.0
    %437 = vmatpush1.msra.mxu0 %v30
    %438 = vmatprep.subr.mxu0 0.0
    %439 = vmatpush1.msra.mxu0 %v31
    %440 = vmatprep.subr.mxu0 0.0
    %441 = vmatpush1.msra.mxu0 %v32
    %442 = vmatprep.subr.mxu0 0.0
    %443 = vmatpush1.msra.mxu0 %v33
    %444 = vmatprep.subr.mxu0 0.0
    %445 = vmatpush1.msra.mxu0 %v34
    %446 = vmatprep.subr.mxu0 0.0
    %447 = vmatpush1.msra.mxu0 %v35
    %448 = vmatprep.subr.mxu0 0.0
    %449 = vmatpush1.msra.mxu0 %v36
    %450 = vmatprep.subr.mxu0 0.0
    %451 = vmatpush1.msra.mxu0 %v37
    %452 = vmatprep.subr.mxu0 0.0
    %453 = vmatpush1.msra.mxu0 %v38
    %454 = vmatprep.subr.mxu0 0.0
    %455 = vmatpush1.msra.mxu0 %v39
    %456 = vmatprep.subr.mxu0 0.0
    %457 = vmatpush1.msra.mxu0 0.0
    %458 = vmatprep.subr.mxu0 0.0
    %459 = vmatpush1.msra.mxu0 0.0
    %460 = vmatprep.subr.mxu0 0.0
    %461 = vmatpush1.msra.mxu0 0.0
    %462 = vmatprep.subr.mxu0 0.0
    %463 = vmatpush1.msra.mxu0 0.0
    %464 = vmatprep.subr.mxu0 0.0
    %465 = vmatpush1.msra.mxu0 0.0
    %466 = vmatprep.subr.mxu0 0.0
    %467 = vmatpush1.msra.mxu0 0.0
    %468 = vmatprep.subr.mxu0 0.0
    %469 = vmatpush1.msra.mxu0 0.0
    %470 = vmatprep.subr.mxu0 0.0
    %471 = vmatpush1.msra.mxu0 0.0
    %472 = vmatprep.subr.mxu0 0.0
    %473 = vmatpush1.msra.mxu0 0.0
    %474 = vmatprep.subr.mxu0 0.0
    %475 = vmatpush1.msra.mxu0 0.0
    %476 = vmatprep.subr.mxu0 0.0
    %477 = vmatpush1.msra.mxu0 0.0
    %478 = vmatprep.subr.mxu0 0.0
    %479 = vmatpush1.msra.mxu0 0.0
    %480 = vmatprep.subr.mxu0 0.0
    %481 = vmatpush1.msra.mxu0 0.0
    %482 = vmatprep.subr.mxu0 0.0
    %483 = vmatpush1.msra.mxu0 0.0
    %484 = vmatprep.subr.mxu0 0.0
    %485 = vmatpush1.msra.mxu0 0.0
    %486 = vmatprep.subr.mxu0 0.0
    %487 = vmatpush1.msra.mxu0 0.0
    %488 = vmatprep.mubr.f32.mxu0 0.0
    %489 = vmatmul.mubr.f32.gmra.mrb[0].mxu0 %v350
    %v490 = vpop.f32.mrb[0].mxu0
    %v491 = vadd.f32 %v421, %v490
    %v492 = vpop.f32.mrb[0].mxu0
    %493 = vdwg.mxu0
    %v494 = vtanh.pop %v491
    %495 = vset.pattern.permute.xlu0 3
    %496 = vperm.xlu0 %495, %v21
    %v497 = vpop.permute.xlu0 %496
    %vm498 = vcmp.eq.s32.totalorder %v497, %v23
    %v499 = vsel %vm498, 1, 0
    %v500 = vcvt.s32.f32 %v499
    %v502 = vsel %vm50, %v494, 0
    %504 = vmatprep.subr.mxu0 0.0
    %505 = vmatpush1.msra.mxu0 %v40
    %506 = vmatprep.subr.mxu0 0.0
    %507 = vmatpush1.msra.mxu0 %v41
    %508 = vmatprep.subr.mxu0 0.0
    %509 = vmatpush1.msra.mxu0 %v42
    %510 = vmatprep.subr.mxu0 0.0
    %511 = vmatpush1.msra.mxu0 %v43
    %512 = vmatprep.subr.mxu0 0.0
    %513 = vmatpush1.msra.mxu0 0.0
    %514 = vmatprep.subr.mxu0 0.0
    %515 = vmatpush1.msra.mxu0 0.0
    %516 = vmatprep.subr.mxu0 0.0
    %517 = vmatpush1.msra.mxu0 0.0
    %518 = vmatprep.subr.mxu0 0.0
    %519 = vmatpush1.msra.mxu0 0.0
    %520 = vmatprep.subr.mxu0 0.0
    %521 = vmatpush1.msra.mxu0 0.0
    %522 = vmatprep.subr.mxu0 0.0
    %523 = vmatpush1.msra.mxu0 0.0
    %524 = vmatprep.subr.mxu0 0.0
    %525 = vmatpush1.msra.mxu0 0.0
    %526 = vmatprep.subr.mxu0 0.0
    %527 = vmatpush1.msra.mxu0 0.0
    %528 = vmatprep.subr.mxu0 0.0
    %529 = vmatpush1.msra.mxu0 0.0
    %530 = vmatprep.subr.mxu0 0.0
    %531 = vmatpush1.msra.mxu0 0.0
    %532 = vmatprep.subr.mxu0 0.0
    %533 = vmatpush1.msra.mxu0 0.0
    %534 = vmatprep.subr.mxu0 0.0
    %535 = vmatpush1.msra.mxu0 0.0
    %536 = vmatprep.subr.mxu0 0.0
    %537 = vmatpush1.msra.mxu0 0.0
    %538 = vmatprep.subr.mxu0 0.0
    %539 = vmatpush1.msra.mxu0 0.0
    %540 = vmatprep.subr.mxu0 0.0
    %541 = vmatpush1.msra.mxu0 0.0
    %542 = vmatprep.subr.mxu0 0.0
    %543 = vmatpush1.msra.mxu0 0.0
    %544 = vmatprep.subr.mxu0 0.0
    %545 = vmatpush1.msra.mxu0 0.0
    %546 = vmatprep.subr.mxu0 0.0
    %547 = vmatpush1.msra.mxu0 0.0
    %548 = vmatprep.subr.mxu0 0.0
    %549 = vmatpush1.msra.mxu0 0.0
    %550 = vmatprep.subr.mxu0 0.0
    %551 = vmatpush1.msra.mxu0 0.0
    %552 = vmatprep.subr.mxu0 0.0
    %553 = vmatpush1.msra.mxu0 0.0
    %554 = vmatprep.subr.mxu0 0.0
    %555 = vmatpush1.msra.mxu0 0.0
    %556 = vmatprep.subr.mxu0 0.0
    %557 = vmatpush1.msra.mxu0 0.0
    %558 = vmatprep.subr.mxu0 0.0
    %559 = vmatpush1.msra.mxu0 0.0
    %560 = vmatprep.subr.mxu0 0.0
    %561 = vmatpush1.msra.mxu0 0.0
    %562 = vmatprep.subr.mxu0 0.0
    %563 = vmatpush1.msra.mxu0 0.0
    %564 = vmatprep.subr.mxu0 0.0
    %565 = vmatpush1.msra.mxu0 0.0
    %566 = vmatprep.subr.mxu0 0.0
    %567 = vmatpush1.msra.mxu0 0.0
    %568 = vmatprep.mubr.f32.mxu0 0.0
    %569 = vmatmul.mubr.f32.gmra.mrb[0].mxu0 %v502
    %v570 = vpop.f32.mrb[0].mxu0
    %v571 = vadd.f32 0.0, %v570
    %v572 = vpop.f32.mrb[0].mxu0
    %573 = vdwg.mxu0
    %574 = vmatprep.subr.mxu0 0.0
    %575 = vmatpush1.msra.mxu0 %v24
    %576 = vmatprep.subr.mxu0 0.0
    %577 = vmatpush1.msra.mxu0 %v25
    %578 = vmatprep.subr.mxu0 0.0
    %579 = vmatpush1.msra.mxu0 %v26
    %580 = vmatprep.subr.mxu0 0.0
    %581 = vmatpush1.msra.mxu0 %v27
    %582 = vmatprep.subr.mxu0 0.0
    %583 = vmatpush1.msra.mxu0 %v28
    %584 = vmatprep.subr.mxu0 0.0
    %585 = vmatpush1.msra.mxu0 %v29
    %586 = vmatprep.subr.mxu0 0.0
    %587 = vmatpush1.msra.mxu0 %v30
    %588 = vmatprep.subr.mxu0 0.0
    %589 = vmatpush1.msra.mxu0 %v31
    %590 = vmatprep.subr.mxu0 0.0
    %591 = vmatpush1.msra.mxu0 %v32
    %592 = vmatprep.subr.mxu0 0.0
    %593 = vmatpush1.msra.mxu0 %v33
    %594 = vmatprep.subr.mxu0 0.0
    %595 = vmatpush1.msra.mxu0 %v34
    %596 = vmatprep.subr.mxu0 0.0
    %597 = vmatpush1.msra.mxu0 %v35
    %598 = vmatprep.subr.mxu0 0.0
    %599 = vmatpush1.msra.mxu0 %v36
    %600 = vmatprep.subr.mxu0 0.0
    %601 = vmatpush1.msra.mxu0 %v37
    %602 = vmatprep.subr.mxu0 0.0
    %603 = vmatpush1.msra.mxu0 %v38
    %604 = vmatprep.subr.mxu0 0.0
    %605 = vmatpush1.msra.mxu0 %v39
    %606 = vmatprep.subr.mxu0 0.0
    %607 = vmatpush1.msra.mxu0 0.0
    %608 = vmatprep.subr.mxu0 0.0
    %609 = vmatpush1.msra.mxu0 0.0
    %610 = vmatprep.subr.mxu0 0.0
    %611 = vmatpush1.msra.mxu0 0.0
    %612 = vmatprep.subr.mxu0 0.0
    %613 = vmatpush1.msra.mxu0 0.0
    %614 = vmatprep.subr.mxu0 0.0
    %615 = vmatpush1.msra.mxu0 0.0
    %616 = vmatprep.subr.mxu0 0.0
    %617 = vmatpush1.msra.mxu0 0.0
    %618 = vmatprep.subr.mxu0 0.0
    %619 = vmatpush1.msra.mxu0 0.0
    %620 = vmatprep.subr.mxu0 0.0
    %621 = vmatpush1.msra.mxu0 0.0
    %622 = vmatprep.subr.mxu0 0.0
    %623 = vmatpush1.msra.mxu0 0.0
    %624 = vmatprep.subr.mxu0 0.0
    %625 = vmatpush1.msra.mxu0 0.0
    %626 = vmatprep.subr.mxu0 0.0
    %627 = vmatpush1.msra.mxu0 0.0
    %628 = vmatprep.subr.mxu0 0.0
    %629 = vmatpush1.msra.mxu0 0.0
    %630 = vmatprep.subr.mxu0 0.0
    %631 = vmatpush1.msra.mxu0 0.0
    %632 = vmatprep.subr.mxu0 0.0
    %633 = vmatpush1.msra.mxu0 0.0
    %634 = vmatprep.subr.mxu0 0.0
    %635 = vmatpush1.msra.mxu0 0.0
    %636 = vmatprep.subr.mxu0 0.0
    %637 = vmatpush1.msra.mxu0 0.0
    %638 = vmatprep.mubr.f32.mxu0 0.0
    %639 = vmatmul.mubr.f32.gmra.mrb[0].mxu0 %v500
    %v640 = vpop.f32.mrb[0].mxu0
    %v641 = vadd.f32 %v571, %v640
    %v642 = vpop.f32.mrb[0].mxu0
    %643 = vdwg.mxu0
    %v644 = vtanh.pop %v641
    %645 = vset.pattern.permute.xlu0 4
    %646 = vperm.xlu0 %645, %v21
    %v647 = vpop.permute.xlu0 %646
    %vm648 = vcmp.eq.s32.totalorder %v647, %v23
    %v649 = vsel %vm648, 1, 0
    %v650 = vcvt.s32.f32 %v649
    %v652 = vsel %vm50, %v644, 0
    %654 = vmatprep.subr.mxu0 0.0
    %655 = vmatpush1.msra.mxu0 %v40
    %656 = vmatprep.subr.mxu0 0.0
    %657 = vmatpush1.msra.mxu0 %v41
    %658 = vmatprep.subr.mxu0 0.0
    %659 = vmatpush1.msra.mxu0 %v42
    %660 = vmatprep.subr.mxu0 0.0
    %661 = vmatpush1.msra.mxu0 %v43
    %662 = vmatprep.subr.mxu0 0.0
    %663 = vmatpush1.msra.mxu0 0.0
    %664 = vmatprep.subr.mxu0 0.0
    %665 = vmatpush1.msra.mxu0 0.0
    %666 = vmatprep.subr.mxu0 0.0
    %667 = vmatpush1.msra.mxu0 0.0
    %668 = vmatprep.subr.mxu0 0.0
    %669 = vmatpush1.msra.mxu0 0.0
    %670 = vmatprep.subr.mxu0 0.0
    %671 = vmatpush1.msra.mxu0 0.0
    %672 = vmatprep.subr.mxu0 0.0
    %673 = vmatpush1.msra.mxu0 0.0
    %674 = vmatprep.subr.mxu0 0.0
    %675 = vmatpush1.msra.mxu0 0.0
    %676 = vmatprep.subr.mxu0 0.0
    %677 = vmatpush1.msra.mxu0 0.0
    %678 = vmatprep.subr.mxu0 0.0
    %679 = vmatpush1.msra.mxu0 0.0
    %680 = vmatprep.subr.mxu0 0.0
    %681 = vmatpush1.msra.mxu0 0.0
    %682 = vmatprep.subr.mxu0 0.0
    %683 = vmatpush1.msra.mxu0 0.0
    %684 = vmatprep.subr.mxu0 0.0
    %685 = vmatpush1.msra.mxu0 0.0
    %686 = vmatprep.subr.mxu0 0.0
    %687 = vmatpush1.msra.mxu0 0.0
    %688 = vmatprep.subr.mxu0 0.0
    %689 = vmatpush1.msra.mxu0 0.0
    %690 = vmatprep.subr.mxu0 0.0
    %691 = vmatpush1.msra.mxu0 0.0
    %692 = vmatprep.subr.mxu0 0.0
    %693 = vmatpush1.msra.mxu0 0.0
    %694 = vmatprep.subr.mxu0 0.0
    %695 = vmatpush1.msra.mxu0 0.0
    %696 = vmatprep.subr.mxu0 0.0
    %697 = vmatpush1.msra.mxu0 0.0
    %698 = vmatprep.subr.mxu0 0.0
    %699 = vmatpush1.msra.mxu0 0.0
    %700 = vmatprep.subr.mxu0 0.0
    %701 = vmatpush1.msra.mxu0 0.0
    %702 = vmatprep.subr.mxu0 0.0
    %703 = vmatpush1.msra.mxu0 0.0
    %704 = vmatprep.subr.mxu0 0.0
    %705 = vmatpush1.msra.mxu0 0.0
    %706 = vmatprep.subr.mxu0 0.0
    %707 = vmatpush1.msra.mxu0 0.0
    %708 = vmatprep.subr.mxu0 0.0
    %709 = vmatpush1.msra.mxu0 0.0
    %710 = vmatprep.subr.mxu0 0.0
    %711 = vmatpush1.msra.mxu0 0.0
    %712 = vmatprep.subr.mxu0 0.0
    %713 = vmatpush1.msra.mxu0 0.0
    %714 = vmatprep.subr.mxu0 0.0
    %715 = vmatpush1.msra.mxu0 0.0
    %716 = vmatprep.subr.mxu0 0.0
    %717 = vmatpush1.msra.mxu0 0.0
    %718 = vmatprep.mubr.f32.mxu0 0.0
    %719 = vmatmul.mubr.f32.gmra.mrb[0].mxu0 %v652
    %v720 = vpop.f32.mrb[0].mxu0
    %v721 = vadd.f32 0.0, %v720
    %v722 = vpop.f32.mrb[0].mxu0
    %723 = vdwg.mxu0
    %724 = vmatprep.subr.mxu0 0.0
    %725 = vmatpush1.msra.mxu0 %v24
    %726 = vmatprep.subr.mxu0 0.0
    %727 = vmatpush1.msra.mxu0 %v25
    %728 = vmatprep.subr.mxu0 0.0
    %729 = vmatpush1.msra.mxu0 %v26
    %730 = vmatprep.subr.mxu0 0.0
    %731 = vmatpush1.msra.mxu0 %v27
    %732 = vmatprep.subr.mxu0 0.0
    %733 = vmatpush1.msra.mxu0 %v28
    %734 = vmatprep.subr.mxu0 0.0
    %735 = vmatpush1.msra.mxu0 %v29
    %736 = vmatprep.subr.mxu0 0.0
    %737 = vmatpush1.msra.mxu0 %v30
    %738 = vmatprep.subr.mxu0 0.0
    %739 = vmatpush1.msra.mxu0 %v31
    %740 = vmatprep.subr.mxu0 0.0
    %741 = vmatpush1.msra.mxu0 %v32
    %742 = vmatprep.subr.mxu0 0.0
    %743 = vmatpush1.msra.mxu0 %v33
    %744 = vmatprep.subr.mxu0 0.0
    %745 = vmatpush1.msra.mxu0 %v34
    %746 = vmatprep.subr.mxu0 0.0
    %747 = vmatpush1.msra.mxu0 %v35
    %748 = vmatprep.subr.mxu0 0.0
    %749 = vmatpush1.msra.mxu0 %v36
    %750 = vmatprep.subr.mxu0 0.0
    %751 = vmatpush1.msra.mxu0 %v37
    %752 = vmatprep.subr.mxu0 0.0
    %753 = vmatpush1.msra.mxu0 %v38
    %754 = vmatprep.subr.mxu0 0.0
    %755 = vmatpush1.msra.mxu0 %v39
    %756 = vmatprep.subr.mxu0 0.0
    %757 = vmatpush1.msra.mxu0 0.0
    %758 = vmatprep.subr.mxu0 0.0
    %759 = vmatpush1.msra.mxu0 0.0
    %760 = vmatprep.subr.mxu0 0.0
    %761 = vmatpush1.msra.mxu0 0.0
    %762 = vmatprep.subr.mxu0 0.0
    %763 = vmatpush1.msra.mxu0 0.0
    %764 = vmatprep.subr.mxu0 0.0
    %765 = vmatpush1.msra.mxu0 0.0
    %766 = vmatprep.subr.mxu0 0.0
    %767 = vmatpush1.msra.mxu0 0.0
    %768 = vmatprep.subr.mxu0 0.0
    %769 = vmatpush1.msra.mxu0 0.0
    %770 = vmatprep.subr.mxu0 0.0
    %771 = vmatpush1.msra.mxu0 0.0
    %772 = vmatprep.subr.mxu0 0.0
    %773 = vmatpush1.msra.mxu0 0.0
    %774 = vmatprep.subr.mxu0 0.0
    %775 = vmatpush1.msra.mxu0 0.0
    %776 = vmatprep.subr.mxu0 0.0
    %777 = vmatpush1.msra.mxu0 0.0
    %778 = vmatprep.subr.mxu0 0.0
    %779 = vmatpush1.msra.mxu0 0.0
    %780 = vmatprep.subr.mxu0 0.0
    %781 = vmatpush1.msra.mxu0 0.0
    %782 = vmatprep.subr.mxu0 0.0
    %783 = vmatpush1.msra.mxu0 0.0
    %784 = vmatprep.subr.mxu0 0.0
    %785 = vmatpush1.msra.mxu0 0.0
    %786 = vmatprep.subr.mxu0 0.0
    %787 = vmatpush1.msra.mxu0 0.0
    %788 = vmatprep.mubr.f32.mxu0 0.0
    %789 = vmatmul.mubr.f32.gmra.mrb[0].mxu0 %v650
    %v790 = vpop.f32.mrb[0].mxu0
    %v791 = vadd.f32 %v721, %v790
    %v792 = vpop.f32.mrb[0].mxu0
    %793 = vdwg.mxu0
    %v794 = vtanh.pop %v791
    %795 = vset.pattern.permute.xlu0 5
    %796 = vperm.xlu0 %795, %v21
    %v797 = vpop.permute.xlu0 %796
    %vm798 = vcmp.eq.s32.totalorder %v797, %v23
    %v799 = vsel %vm798, 1, 0
    %v800 = vcvt.s32.f32 %v799
    %v802 = vsel %vm50, %v794, 0
    %804 = vmatprep.subr.mxu0 0.0
    %805 = vmatpush1.msra.mxu0 %v40
    %806 = vmatprep.subr.mxu0 0.0
    %807 = vmatpush1.msra.mxu0 %v41
    %808 = vmatprep.subr.mxu0 0.0
    %809 = vmatpush1.msra.mxu0 %v42
    %810 = vmatprep.subr.mxu0 0.0
    %811 = vmatpush1.msra.mxu0 %v43
    %812 = vmatprep.subr.mxu0 0.0
    %813 = vmatpush1.msra.mxu0 0.0
    %814 = vmatprep.subr.mxu0 0.0
    %815 = vmatpush1.msra.mxu0 0.0
    %816 = vmatprep.subr.mxu0 0.0
    %817 = vmatpush1.msra.mxu0 0.0
    %818 = vmatprep.subr.mxu0 0.0
    %819 = vmatpush1.msra.mxu0 0.0
    %820 = vmatprep.subr.mxu0 0.0
    %821 = vmatpush1.msra.mxu0 0.0
    %822 = vmatprep.subr.mxu0 0.0
    %823 = vmatpush1.msra.mxu0 0.0
    %824 = vmatprep.subr.mxu0 0.0
    %825 = vmatpush1.msra.mxu0 0.0
    %826 = vmatprep.subr.mxu0 0.0
    %827 = vmatpush1.msra.mxu0 0.0
    %828 = vmatprep.subr.mxu0 0.0
    %829 = vmatpush1.msra.mxu0 0.0
    %830 = vmatprep.subr.mxu0 0.0
    %831 = vmatpush1.msra.mxu0 0.0
    %832 = vmatprep.subr.mxu0 0.0
    %833 = vmatpush1.msra.mxu0 0.0
    %834 = vmatprep.subr.mxu0 0.0
    %835 = vmatpush1.msra.mxu0 0.0
    %836 = vmatprep.subr.mxu0 0.0
    %837 = vmatpush1.msra.mxu0 0.0
    %838 = vmatprep.subr.mxu0 0.0
    %839 = vmatpush1.msra.mxu0 0.0
    %840 = vmatprep.subr.mxu0 0.0
    %841 = vmatpush1.msra.mxu0 0.0
    %842 = vmatprep.subr.mxu0 0.0
    %843 = vmatpush1.msra.mxu0 0.0
    %844 = vmatprep.subr.mxu0 0.0
    %845 = vmatpush1.msra.mxu0 0.0
    %846 = vmatprep.subr.mxu0 0.0
    %847 = vmatpush1.msra.mxu0 0.0
    %848 = vmatprep.subr.mxu0 0.0
    %849 = vmatpush1.msra.mxu0 0.0
    %850 = vmatprep.subr.mxu0 0.0
    %851 = vmatpush1.msra.mxu0 0.0
    %852 = vmatprep.subr.mxu0 0.0
    %853 = vmatpush1.msra.mxu0 0.0
    %854 = vmatprep.subr.mxu0 0.0
    %855 = vmatpush1.msra.mxu0 0.0
    %856 = vmatprep.subr.mxu0 0.0
    %857 = vmatpush1.msra.mxu0 0.0
    %858 = vmatprep.subr.mxu0 0.0
    %859 = vmatpush1.msra.mxu0 0.0
    %860 = vmatprep.subr.mxu0 0.0
    %861 = vmatpush1.msra.mxu0 0.0
    %862 = vmatprep.subr.mxu0 0.0
    %863 = vmatpush1.msra.mxu0 0.0
    %864 = vmatprep.subr.mxu0 0.0
    %865 = vmatpush1.msra.mxu0 0.0
    %866 = vmatprep.subr.mxu0 0.0
    %867 = vmatpush1.msra.mxu0 0.0
    %868 = vmatprep.mubr.f32.mxu0 0.0
    %869 = vmatmul.mubr.f32.gmra.mrb[0].mxu0 %v802
    %v870 = vpop.f32.mrb[0].mxu0
    %v871 = vadd.f32 0.0, %v870
    %v872 = vpop.f32.mrb[0].mxu0
    %873 = vdwg.mxu0
    %874 = vmatprep.subr.mxu0 0.0
    %875 = vmatpush1.msra.mxu0 %v24
    %876 = vmatprep.subr.mxu0 0.0
    %877 = vmatpush1.msra.mxu0 %v25
    %878 = vmatprep.subr.mxu0 0.0
    %879 = vmatpush1.msra.mxu0 %v26
    %880 = vmatprep.subr.mxu0 0.0
    %881 = vmatpush1.msra.mxu0 %v27
    %882 = vmatprep.subr.mxu0 0.0
    %883 = vmatpush1.msra.mxu0 %v28
    %884 = vmatprep.subr.mxu0 0.0
    %885 = vmatpush1.msra.mxu0 %v29
    %886 = vmatprep.subr.mxu0 0.0
    %887 = vmatpush1.msra.mxu0 %v30
    %888 = vmatprep.subr.mxu0 0.0
    %889 = vmatpush1.msra.mxu0 %v31
    %890 = vmatprep.subr.mxu0 0.0
    %891 = vmatpush1.msra.mxu0 %v32
    %892 = vmatprep.subr.mxu0 0.0
    %893 = vmatpush1.msra.mxu0 %v33
    %894 = vmatprep.subr.mxu0 0.0
    %895 = vmatpush1.msra.mxu0 %v34
    %896 = vmatprep.subr.mxu0 0.0
    %897 = vmatpush1.msra.mxu0 %v35
    %898 = vmatprep.subr.mxu0 0.0
    %899 = vmatpush1.msra.mxu0 %v36
    %900 = vmatprep.subr.mxu0 0.0
    %901 = vmatpush1.msra.mxu0 %v37
    %902 = vmatprep.subr.mxu0 0.0
    %903 = vmatpush1.msra.mxu0 %v38
    %904 = vmatprep.subr.mxu0 0.0
    %905 = vmatpush1.msra.mxu0 %v39
    %906 = vmatprep.subr.mxu0 0.0
    %907 = vmatpush1.msra.mxu0 0.0
    %908 = vmatprep.subr.mxu0 0.0
    %909 = vmatpush1.msra.mxu0 0.0
    %910 = vmatprep.subr.mxu0 0.0
    %911 = vmatpush1.msra.mxu0 0.0
    %912 = vmatprep.subr.mxu0 0.0
    %913 = vmatpush1.msra.mxu0 0.0
    %914 = vmatprep.subr.mxu0 0.0
    %915 = vmatpush1.msra.mxu0 0.0
    %916 = vmatprep.subr.mxu0 0.0
    %917 = vmatpush1.msra.mxu0 0.0
    %918 = vmatprep.subr.mxu0 0.0
    %919 = vmatpush1.msra.mxu0 0.0
    %920 = vmatprep.subr.mxu0 0.0
    %921 = vmatpush1.msra.mxu0 0.0
    %922 = vmatprep.subr.mxu0 0.0
    %923 = vmatpush1.msra.mxu0 0.0
    %924 = vmatprep.subr.mxu0 0.0
    %925 = vmatpush1.msra.mxu0 0.0
    %926 = vmatprep.subr.mxu0 0.0
    %927 = vmatpush1.msra.mxu0 0.0
    %928 = vmatprep.subr.mxu0 0.0
    %929 = vmatpush1.msra.mxu0 0.0
    %930 = vmatprep.subr.mxu0 0.0
    %931 = vmatpush1.msra.mxu0 0.0
    %932 = vmatprep.subr.mxu0 0.0
    %933 = vmatpush1.msra.mxu0 0.0
    %934 = vmatprep.subr.mxu0 0.0
    %935 = vmatpush1.msra.mxu0 0.0
    %936 = vmatprep.subr.mxu0 0.0
    %937 = vmatpush1.msra.mxu0 0.0
    %938 = vmatprep.mubr.f32.mxu0 0.0
    %939 = vmatmul.mubr.f32.gmra.mrb[0].mxu0 %v800
    %v940 = vpop.f32.mrb[0].mxu0
    %v941 = vadd.f32 %v871, %v940
    %v942 = vpop.f32.mrb[0].mxu0
    %943 = vdwg.mxu0
    %v944 = vtanh.pop %v941
    %945 = vset.pattern.permute.xlu0 6
    %946 = vperm.xlu0 %945, %v21
    %v947 = vpop.permute.xlu0 %946
    %vm948 = vcmp.eq.s32.totalorder %v947, %v23
    %v949 = vsel %vm948, 1, 0
    %v950 = vcvt.s32.f32 %v949
    %v952 = vsel %vm50, %v944, 0
    %954 = vmatprep.subr.mxu0 0.0
    %955 = vmatpush1.msra.mxu0 %v40
    %956 = vmatprep.subr.mxu0 0.0
    %957 = vmatpush1.msra.mxu0 %v41
    %958 = vmatprep.subr.mxu0 0.0
    %959 = vmatpush1.msra.mxu0 %v42
    %960 = vmatprep.subr.mxu0 0.0
    %961 = vmatpush1.msra.mxu0 %v43
    %962 = vmatprep.subr.mxu0 0.0
    %963 = vmatpush1.msra.mxu0 0.0
    %964 = vmatprep.subr.mxu0 0.0
    %965 = vmatpush1.msra.mxu0 0.0
    %966 = vmatprep.subr.mxu0 0.0
    %967 = vmatpush1.msra.mxu0 0.0
    %968 = vmatprep.subr.mxu0 0.0
    %969 = vmatpush1.msra.mxu0 0.0
    %970 = vmatprep.subr.mxu0 0.0
    %971 = vmatpush1.msra.mxu0 0.0
    %972 = vmatprep.subr.mxu0 0.0
    %973 = vmatpush1.msra.mxu0 0.0
    %974 = vmatprep.subr.mxu0 0.0
    %975 = vmatpush1.msra.mxu0 0.0
    %976 = vmatprep.subr.mxu0 0.0
    %977 = vmatpush1.msra.mxu0 0.0
    %978 = vmatprep.subr.mxu0 0.0
    %979 = vmatpush1.msra.mxu0 0.0
    %980 = vmatprep.subr.mxu0 0.0
    %981 = vmatpush1.msra.mxu0 0.0
    %982 = vmatprep.subr.mxu0 0.0
    %983 = vmatpush1.msra.mxu0 0.0
    %984 = vmatprep.subr.mxu0 0.0
    %985 = vmatpush1.msra.mxu0 0.0
    %986 = vmatprep.subr.mxu0 0.0
    %987 = vmatpush1.msra.mxu0 0.0
    %988 = vmatprep.subr.mxu0 0.0
    %989 = vmatpush1.msra.mxu0 0.0
    %990 = vmatprep.subr.mxu0 0.0
    %991 = vmatpush1.msra.mxu0 0.0
    %992 = vmatprep.subr.mxu0 0.0
    %993 = vmatpush1.msra.mxu0 0.0
    %994 = vmatprep.subr.mxu0 0.0
    %995 = vmatpush1.msra.mxu0 0.0
    %996 = vmatprep.subr.mxu0 0.0
    %997 = vmatpush1.msra.mxu0 0.0
    %998 = vmatprep.subr.mxu0 0.0
    %999 = vmatpush1.msra.mxu0 0.0
    %1000 = vmatprep.subr.mxu0 0.0
    %1001 = vmatpush1.msra.mxu0 0.0
    %1002 = vmatprep.subr.mxu0 0.0
    %1003 = vmatpush1.msra.mxu0 0.0
    %1004 = vmatprep.subr.mxu0 0.0
    %1005 = vmatpush1.msra.mxu0 0.0
    %1006 = vmatprep.subr.mxu0 0.0
    %1007 = vmatpush1.msra.mxu0 0.0
    %1008 = vmatprep.subr.mxu0 0.0
    %1009 = vmatpush1.msra.mxu0 0.0
    %1010 = vmatprep.subr.mxu0 0.0
    %1011 = vmatpush1.msra.mxu0 0.0
    %1012 = vmatprep.subr.mxu0 0.0
    %1013 = vmatpush1.msra.mxu0 0.0
    %1014 = vmatprep.subr.mxu0 0.0
    %1015 = vmatpush1.msra.mxu0 0.0
    %1016 = vmatprep.subr.mxu0 0.0
    %1017 = vmatpush1.msra.mxu0 0.0
    %1018 = vmatprep.mubr.f32.mxu0 0.0
    %1019 = vmatmul.mubr.f32.gmra.mrb[0].mxu0 %v952
    %v1020 = vpop.f32.mrb[0].mxu0
    %v1021 = vadd.f32 0.0, %v1020
    %v1022 = vpop.f32.mrb[0].mxu0
    %1023 = vdwg.mxu0
    %1024 = vmatprep.subr.mxu0 0.0
    %1025 = vmatpush1.msra.mxu0 %v24
    %1026 = vmatprep.subr.mxu0 0.0
    %1027 = vmatpush1.msra.mxu0 %v25
    %1028 = vmatprep.subr.mxu0 0.0
    %1029 = vmatpush1.msra.mxu0 %v26
    %1030 = vmatprep.subr.mxu0 0.0
    %1031 = vmatpush1.msra.mxu0 %v27
    %1032 = vmatprep.subr.mxu0 0.0
    %1033 = vmatpush1.msra.mxu0 %v28
    %1034 = vmatprep.subr.mxu0 0.0
    %1035 = vmatpush1.msra.mxu0 %v29
    %1036 = vmatprep.subr.mxu0 0.0
    %1037 = vmatpush1.msra.mxu0 %v30
    %1038 = vmatprep.subr.mxu0 0.0
    %1039 = vmatpush1.msra.mxu0 %v31
    %1040 = vmatprep.subr.mxu0 0.0
    %1041 = vmatpush1.msra.mxu0 %v32
    %1042 = vmatprep.subr.mxu0 0.0
    %1043 = vmatpush1.msra.mxu0 %v33
    %1044 = vmatprep.subr.mxu0 0.0
    %1045 = vmatpush1.msra.mxu0 %v34
    %1046 = vmatprep.subr.mxu0 0.0
    %1047 = vmatpush1.msra.mxu0 %v35
    %1048 = vmatprep.subr.mxu0 0.0
    %1049 = vmatpush1.msra.mxu0 %v36
    %1050 = vmatprep.subr.mxu0 0.0
    %1051 = vmatpush1.msra.mxu0 %v37
    %1052 = vmatprep.subr.mxu0 0.0
    %1053 = vmatpush1.msra.mxu0 %v38
    %1054 = vmatprep.subr.mxu0 0.0
    %1055 = vmatpush1.msra.mxu0 %v39
    %1056 = vmatprep.subr.mxu0 0.0
    %1057 = vmatpush1.msra.mxu0 0.0
    %1058 = vmatprep.subr.mxu0 0.0
    %1059 = vmatpush1.msra.mxu0 0.0
    %1060 = vmatprep.subr.mxu0 0.0
    %1061 = vmatpush1.msra.mxu0 0.0
    %1062 = vmatprep.subr.mxu0 0.0
    %1063 = vmatpush1.msra.mxu0 0.0
    %1064 = vmatprep.subr.mxu0 0.0
    %1065 = vmatpush1.msra.mxu0 0.0
    %1066 = vmatprep.subr.mxu0 0.0
    %1067 = vmatpush1.msra.mxu0 0.0
    %1068 = vmatprep.subr.mxu0 0.0
    %1069 = vmatpush1.msra.mxu0 0.0
    %1070 = vmatprep.subr.mxu0 0.0
    %1071 = vmatpush1.msra.mxu0 0.0
    %1072 = vmatprep.subr.mxu0 0.0
    %1073 = vmatpush1.msra.mxu0 0.0
    %1074 = vmatprep.subr.mxu0 0.0
    %1075 = vmatpush1.msra.mxu0 0.0
    %1076 = vmatprep.subr.mxu0 0.0
    %1077 = vmatpush1.msra.mxu0 0.0
    %1078 = vmatprep.subr.mxu0 0.0
    %1079 = vmatpush1.msra.mxu0 0.0
    %1080 = vmatprep.subr.mxu0 0.0
    %1081 = vmatpush1.msra.mxu0 0.0
    %1082 = vmatprep.subr.mxu0 0.0
    %1083 = vmatpush1.msra.mxu0 0.0
    %1084 = vmatprep.subr.mxu0 0.0
    %1085 = vmatpush1.msra.mxu0 0.0
    %1086 = vmatprep.subr.mxu0 0.0
    %1087 = vmatpush1.msra.mxu0 0.0
    %1088 = vmatprep.mubr.f32.mxu0 0.0
    %1089 = vmatmul.mubr.f32.gmra.mrb[0].mxu0 %v950
    %v1090 = vpop.f32.mrb[0].mxu0
    %v1091 = vadd.f32 %v1021, %v1090
    %v1092 = vpop.f32.mrb[0].mxu0
    %1093 = vdwg.mxu0
    %v1094 = vtanh.pop %v1091
    %1095 = vset.pattern.permute.xlu0 7
    %1096 = vperm.xlu0 %1095, %v21
    %v1097 = vpop.permute.xlu0 %1096
    %vm1098 = vcmp.eq.s32.totalorder %v1097, %v23
    %v1099 = vsel %vm1098, 1, 0
    %v1100 = vcvt.s32.f32 %v1099
    %v1102 = vsel %vm50, %v1094, 0
    %1104 = vmatprep.subr.mxu0 0.0
    %1105 = vmatpush1.msra.mxu0 %v40
    %1106 = vmatprep.subr.mxu0 0.0
    %1107 = vmatpush1.msra.mxu0 %v41
    %1108 = vmatprep.subr.mxu0 0.0
    %1109 = vmatpush1.msra.mxu0 %v42
    %1110 = vmatprep.subr.mxu0 0.0
    %1111 = vmatpush1.msra.mxu0 %v43
    %1112 = vmatprep.subr.mxu0 0.0
    %1113 = vmatpush1.msra.mxu0 0.0
    %1114 = vmatprep.subr.mxu0 0.0
    %1115 = vmatpush1.msra.mxu0 0.0
    %1116 = vmatprep.subr.mxu0 0.0
    %1117 = vmatpush1.msra.mxu0 0.0
    %1118 = vmatprep.subr.mxu0 0.0
    %1119 = vmatpush1.msra.mxu0 0.0
    %1120 = vmatprep.subr.mxu0 0.0
    %1121 = vmatpush1.msra.mxu0 0.0
    %1122 = vmatprep.subr.mxu0 0.0
    %1123 = vmatpush1.msra.mxu0 0.0
    %1124 = vmatprep.subr.mxu0 0.0
    %1125 = vmatpush1.msra.mxu0 0.0
    %1126 = vmatprep.subr.mxu0 0.0
    %1127 = vmatpush1.msra.mxu0 0.0
    %1128 = vmatprep.subr.mxu0 0.0
    %1129 = vmatpush1.msra.mxu0 0.0
    %1130 = vmatprep.subr.mxu0 0.0
    %1131 = vmatpush1.msra.mxu0 0.0
    %1132 = vmatprep.subr.mxu0 0.0
    %1133 = vmatpush1.msra.mxu0 0.0
    %1134 = vmatprep.subr.mxu0 0.0
    %1135 = vmatpush1.msra.mxu0 0.0
    %1136 = vmatprep.subr.mxu0 0.0
    %1137 = vmatpush1.msra.mxu0 0.0
    %1138 = vmatprep.subr.mxu0 0.0
    %1139 = vmatpush1.msra.mxu0 0.0
    %1140 = vmatprep.subr.mxu0 0.0
    %1141 = vmatpush1.msra.mxu0 0.0
    %1142 = vmatprep.subr.mxu0 0.0
    %1143 = vmatpush1.msra.mxu0 0.0
    %1144 = vmatprep.subr.mxu0 0.0
    %1145 = vmatpush1.msra.mxu0 0.0
    %1146 = vmatprep.subr.mxu0 0.0
    %1147 = vmatpush1.msra.mxu0 0.0
    %1148 = vmatprep.subr.mxu0 0.0
    %1149 = vmatpush1.msra.mxu0 0.0
    %1150 = vmatprep.subr.mxu0 0.0
    %1151 = vmatpush1.msra.mxu0 0.0
    %1152 = vmatprep.subr.mxu0 0.0
    %1153 = vmatpush1.msra.mxu0 0.0
    %1154 = vmatprep.subr.mxu0 0.0
    %1155 = vmatpush1.msra.mxu0 0.0
    %1156 = vmatprep.subr.mxu0 0.0
    %1157 = vmatpush1.msra.mxu0 0.0
    %1158 = vmatprep.subr.mxu0 0.0
    %1159 = vmatpush1.msra.mxu0 0.0
    %1160 = vmatprep.subr.mxu0 0.0
    %1161 = vmatpush1.msra.mxu0 0.0
    %1162 = vmatprep.subr.mxu0 0.0
    %1163 = vmatpush1.msra.mxu0 0.0
    %1164 = vmatprep.subr.mxu0 0.0
    %1165 = vmatpush1.msra.mxu0 0.0
    %1166 = vmatprep.subr.mxu0 0.0
    %1167 = vmatpush1.msra.mxu0 0.0
    %1168 = vmatprep.mubr.f32.mxu0 0.0
    %1169 = vmatmul.mubr.f32.gmra.mrb[0].mxu0 %v1102
    %v1170 = vpop.f32.mrb[0].mxu0
    %v1171 = vadd.f32 0.0, %v1170
    %v1172 = vpop.f32.mrb[0].mxu0
    %1173 = vdwg.mxu0
    %1174 = vmatprep.subr.mxu0 0.0
    %1175 = vmatpush1.msra.mxu0 %v24
    %1176 = vmatprep.subr.mxu0 0.0
    %1177 = vmatpush1.msra.mxu0 %v25
    %1178 = vmatprep.subr.mxu0 0.0
    %1179 = vmatpush1.msra.mxu0 %v26
    %1180 = vmatprep.subr.mxu0 0.0
    %1181 = vmatpush1.msra.mxu0 %v27
    %1182 = vmatprep.subr.mxu0 0.0
    %1183 = vmatpush1.msra.mxu0 %v28
    %1184 = vmatprep.subr.mxu0 0.0
    %1185 = vmatpush1.msra.mxu0 %v29
    %1186 = vmatprep.subr.mxu0 0.0
    %1187 = vmatpush1.msra.mxu0 %v30
    %1188 = vmatprep.subr.mxu0 0.0
    %1189 = vmatpush1.msra.mxu0 %v31
    %1190 = vmatprep.subr.mxu0 0.0
    %1191 = vmatpush1.msra.mxu0 %v32
    %1192 = vmatprep.subr.mxu0 0.0
    %1193 = vmatpush1.msra.mxu0 %v33
    %1194 = vmatprep.subr.mxu0 0.0
    %1195 = vmatpush1.msra.mxu0 %v34
    %1196 = vmatprep.subr.mxu0 0.0
    %1197 = vmatpush1.msra.mxu0 %v35
    %1198 = vmatprep.subr.mxu0 0.0
    %1199 = vmatpush1.msra.mxu0 %v36
    %1200 = vmatprep.subr.mxu0 0.0
    %1201 = vmatpush1.msra.mxu0 %v37
    %1202 = vmatprep.subr.mxu0 0.0
    %1203 = vmatpush1.msra.mxu0 %v38
    %1204 = vmatprep.subr.mxu0 0.0
    %1205 = vmatpush1.msra.mxu0 %v39
    %1206 = vmatprep.subr.mxu0 0.0
    %1207 = vmatpush1.msra.mxu0 0.0
    %1208 = vmatprep.subr.mxu0 0.0
    %1209 = vmatpush1.msra.mxu0 0.0
    %1210 = vmatprep.subr.mxu0 0.0
    %1211 = vmatpush1.msra.mxu0 0.0
    %1212 = vmatprep.subr.mxu0 0.0
    %1213 = vmatpush1.msra.mxu0 0.0
    %1214 = vmatprep.subr.mxu0 0.0
    %1215 = vmatpush1.msra.mxu0 0.0
    %1216 = vmatprep.subr.mxu0 0.0
    %1217 = vmatpush1.msra.mxu0 0.0
    %1218 = vmatprep.subr.mxu0 0.0
    %1219 = vmatpush1.msra.mxu0 0.0
    %1220 = vmatprep.subr.mxu0 0.0
    %1221 = vmatpush1.msra.mxu0 0.0
    %1222 = vmatprep.subr.mxu0 0.0
    %1223 = vmatpush1.msra.mxu0 0.0
    %1224 = vmatprep.subr.mxu0 0.0
    %1225 = vmatpush1.msra.mxu0 0.0
    %1226 = vmatprep.subr.mxu0 0.0
    %1227 = vmatpush1.msra.mxu0 0.0
    %1228 = vmatprep.subr.mxu0 0.0
    %1229 = vmatpush1.msra.mxu0 0.0
    %1230 = vmatprep.subr.mxu0 0.0
    %1231 = vmatpush1.msra.mxu0 0.0
    %1232 = vmatprep.subr.mxu0 0.0
    %1233 = vmatpush1.msra.mxu0 0.0
    %1234 = vmatprep.subr.mxu0 0.0
    %1235 = vmatpush1.msra.mxu0 0.0
    %1236 = vmatprep.subr.mxu0 0.0
    %1237 = vmatpush1.msra.mxu0 0.0
    %1238 = vmatprep.mubr.f32.mxu0 0.0
    %1239 = vmatmul.mubr.f32.gmra.mrb[0].mxu0 %v1100
    %v1240 = vpop.f32.mrb[0].mxu0
    %v1241 = vadd.f32 %v1171, %v1240
    %v1242 = vpop.f32.mrb[0].mxu0
    %1243 = vdwg.mxu0
    %v1244 = vtanh.pop %v1241
    %v1245 = vld [vmem:[%s3] sm:$0xff]
    %v1246 = vld [vmem:[%s3 + $0x8] sm:$0xff]
    %v1247 = vld [vmem:[%s3 + $0x10] sm:$0xff]
    %v1248 = vld [vmem:[%s3 + $0x18] sm:$0xff]
    %v1249 = vld [vmem:[%s4] sm:$0x1]
    %v1251 = vlaneseq
    %v1252 = vshrl.u32 %v1251, 7
    %v1253 = vsub.s32 0, %v1252
    %v1254 = vrot.slane %v1249, %v1253
    %v1257 = vsel %vm50, %v1244, 0
    %1259 = vmatprep.subr.mxu0 0.0
    %1260 = vmatpush1.msra.mxu0 %v1245
    %1261 = vmatprep.subr.mxu0 0.0
    %1262 = vmatpush1.msra.mxu0 %v1246
    %1263 = vmatprep.subr.mxu0 0.0
    %1264 = vmatpush1.msra.mxu0 %v1247
    %1265 = vmatprep.subr.mxu0 0.0
    %1266 = vmatpush1.msra.mxu0 %v1248
    %1267 = vmatprep.subr.mxu0 0.0
    %1268 = vmatpush1.msra.mxu0 0.0
    %1269 = vmatprep.subr.mxu0 0.0
    %1270 = vmatpush1.msra.mxu0 0.0
    %1271 = vmatprep.subr.mxu0 0.0
    %1272 = vmatpush1.msra.mxu0 0.0
    %1273 = vmatprep.subr.mxu0 0.0
    %1274 = vmatpush1.msra.mxu0 0.0
    %1275 = vmatprep.subr.mxu0 0.0
    %1276 = vmatpush1.msra.mxu0 0.0
    %1277 = vmatprep.subr.mxu0 0.0
    %1278 = vmatpush1.msra.mxu0 0.0
    %1279 = vmatprep.subr.mxu0 0.0
    %1280 = vmatpush1.msra.mxu0 0.0
    %1281 = vmatprep.subr.mxu0 0.0
    %1282 = vmatpush1.msra.mxu0 0.0
    %1283 = vmatprep.subr.mxu0 0.0
    %1284 = vmatpush1.msra.mxu0 0.0
    %1285 = vmatprep.subr.mxu0 0.0
    %1286 = vmatpush1.msra.mxu0 0.0
    %1287 = vmatprep.subr.mxu0 0.0
    %1288 = vmatpush1.msra.mxu0 0.0
    %1289 = vmatprep.subr.mxu0 0.0
    %1290 = vmatpush1.msra.mxu0 0.0
    %1291 = vmatprep.subr.mxu0 0.0
    %1292 = vmatpush1.msra.mxu0 0.0
    %1293 = vmatprep.subr.mxu0 0.0
    %1294 = vmatpush1.msra.mxu0 0.0
    %1295 = vmatprep.subr.mxu0 0.0
    %1296 = vmatpush1.msra.mxu0 0.0
    %1297 = vmatprep.subr.mxu0 0.0
    %1298 = vmatpush1.msra.mxu0 0.0
    %1299 = vmatprep.subr.mxu0 0.0
    %1300 = vmatpush1.msra.mxu0 0.0
    %1301 = vmatprep.subr.mxu0 0.0
    %1302 = vmatpush1.msra.mxu0 0.0
    %1303 = vmatprep.subr.mxu0 0.0
    %1304 = vmatpush1.msra.mxu0 0.0
    %1305 = vmatprep.subr.mxu0 0.0
    %1306 = vmatpush1.msra.mxu0 0.0
    %1307 = vmatprep.subr.mxu0 0.0
    %1308 = vmatpush1.msra.mxu0 0.0
    %1309 = vmatprep.subr.mxu0 0.0
    %1310 = vmatpush1.msra.mxu0 0.0
    %1311 = vmatprep.subr.mxu0 0.0
    %1312 = vmatpush1.msra.mxu0 0.0
    %1313 = vmatprep.subr.mxu0 0.0
    %1314 = vmatpush1.msra.mxu0 0.0
    %1315 = vmatprep.subr.mxu0 0.0
    %1316 = vmatpush1.msra.mxu0 0.0
    %1317 = vmatprep.subr.mxu0 0.0
    %1318 = vmatpush1.msra.mxu0 0.0
    %1319 = vmatprep.subr.mxu0 0.0
    %1320 = vmatpush1.msra.mxu0 0.0
    %1321 = vmatprep.subr.mxu0 0.0
    %1322 = vmatpush1.msra.mxu0 0.0
    %1323 = vmatprep.mubr.f32.mxu0 0.0
    %1324 = vmatmul.mubr.f32.gmra.mrb[0].mxu0 %v1257
    %v1325 = vpop.f32.mrb[0].mxu0
    %v1326 = vadd.f32 %v1254, %v1325
    %v1327 = vpop.f32.mrb[0].mxu0
    %1328 = vdwg.mxu0
    %1329 = vst [vmem:[#allocation2] sm:$0xff] %v1326
    // Predicated region
    $region22: #{torch_demo_rnn_forward.1} parent=1 // pred_check
      _
    $region23: #{torch_demo_rnn_forward.1} parent=1 // pred_check_branch
      %1331 = sbr.rel (0) target = $region25
    $region24: #{torch_demo_rnn_forward.1} parent=1 // pred_region
      %s1333 = ssub.s32 128, 128
      %1334 = vsyncadd [#allocation3], %s1333
      %s1336 = sshll.u32 [#allocation2], 4
      %s1337 = int_to_ptr.vmem [resolvable:$true] %s1336
      %1339 = dma.vmem_to_hbm [thread:$0]  %s1337, 128, %s5, [#allocation3]
    $region25: #{torch_demo_rnn_forward.1} parent=1 // pred_fallthru
      _
    // Predicated region
    $region26: #{torch_demo_rnn_forward.1} parent=1 // pred_check
      _
    $region27: #{torch_demo_rnn_forward.1} parent=1 // pred_check_branch
      %1341 = sbr.rel (0) target = $region29
    $region28: #{torch_demo_rnn_forward.1} parent=1 // pred_region
      %1342 = dma.done [#allocation3], 128
    $region29: #{torch_demo_rnn_forward.1} parent=1 // pred_fallthru
      _
    %1343 = vsyncpa [#allocation3], 1

</llo_original>
